<compile_context>
chip_gen: v6e
topology: v6e:2x2x1
jax: 0.10.0
libtpu: 0.0.40
codegen_flags: <defaults>
</compile_context>

<pallas_src>
import functools

import jax
import jax.numpy as jnp
from jax.experimental import pallas as pl
from jax.experimental.pallas import tpu as pltpu


DP = 128            # lane-padded feature width
NEG_SLOPE = 0.01    # leaky_relu default slope


# ---------------------------------------------------------------------------
# Fused Pallas kernel: whole SDNE stack (all GraphConv + leaky_relu layers)
# ---------------------------------------------------------------------------
def sdne_fused_kernel(a_ref, x_ref, w_ref, b_ref,        # inputs
                      recon_ref, emb_ref,                 # outputs
                      h_buf, acc,                         # VMEM scratch
                      *, n_layers, emb_layer, tm, tk):
    l = pl.program_id(0)          # layer index (outermost)
    i = pl.program_id(1)          # node row tile
    k = pl.program_id(2)          # node col tile (aggregation axis, innermost)
    n_k = pl.num_programs(2)

    src = l % 2                   # ping-pong: layer l reads plane `src`,
    dst = (l + 1) % 2             # writes plane `dst` (no end-of-layer copy)

    # One-time init: activation plane 0 <- lane-padded bf16 input features.
    @pl.when((l == 0) & (i == 0) & (k == 0))
    def _():
        h_buf[0] = x_ref[...]

    # Reset the aggregation accumulator at the start of every k sweep.
    @pl.when(k == 0)
    def _():
        acc[...] = jnp.zeros_like(acc)

    # Neighbor aggregation on the native bf16 MXU path (f32 accumulate):
    #   acc += A[i-tile, k-tile] @ H[src][k-tile rows]
    row_k = pl.multiple_of(k * tk, tk)
    h_k = h_buf[src, pl.ds(row_k, tk), :]                          # bf16 (tk, DP)
    acc[...] += jnp.dot(a_ref[...].astype(jnp.bfloat16), h_k,
                        preferred_element_type=jnp.float32)

    # Epilogue at the end of the k sweep: two K=128 MXU dots against static
    # slices of the stacked weights (no lane concat), bias, leaky_relu.
    @pl.when(k == n_k - 1)
    def _():
        r0 = pl.multiple_of(i * tm, tm)
        h_root = h_buf[src, pl.ds(r0, tm), :]                      # bf16 (tm, DP)
        z = jnp.dot(acc[...].astype(jnp.bfloat16), w_ref[0, 0],
                    preferred_element_type=jnp.float32)
        z = z + jnp.dot(h_root, w_ref[0, 1],
                        preferred_element_type=jnp.float32)
        z = z + b_ref[0]                                           # (1, DP) bcast
        new_h = jnp.where(z >= 0.0, z, NEG_SLOPE * z)              # leaky_relu

        # Publish the layer output into the other ping-pong plane.
        h_buf[dst, pl.ds(r0, tm), :] = new_h.astype(jnp.bfloat16)

        # Embedding = output of the last encoder layer (kept at f32).
        @pl.when(l == emb_layer)
        def _():
            emb_ref[pl.ds(r0, tm), :] = new_h

        # Reconstruction = output of the last decoder layer.
        @pl.when(l == n_layers - 1)
        def _():
            recon_ref[pl.ds(r0, tm), :] = new_h


# ---------------------------------------------------------------------------
# Wrapper: padding, parameter packing, pallas_call
# ---------------------------------------------------------------------------
def _round_up(v, m):
    return (v + m - 1) // m * m


def _choose_tiles(n):
    """Adjacency tiling: full-extent (VMEM-resident A across layers) for
    small/mid graphs, large streamed (512, 1024) tiles otherwise."""
    if n <= 2048:
        n_pad = _round_up(n, 128)            # lane-dense, MXU-shaped K
        return n_pad, n_pad, n_pad           # n_pad, TM, TK (full extent)
    tm, tk = 512, 1024
    n_pad = _round_up(n, tk)
    return n_pad, tm, tk


def _vmem_limit_bytes():
    """Per-generation VMEM limit: ~3/4 of physical VMEM (~96 MiB on v5e/v6e,
    ~48 MiB on v7x), with a conservative fallback."""
    try:
        cap = int(pltpu.get_tpu_info().vmem_capacity_bytes)
        return max(32 * 1024 * 1024, (cap * 3) // 4)
    except Exception:
        return 64 * 1024 * 1024


def init_sdne_params(key, input_dim, encoder_dims, embedding_dim, decoder_dims):
    enc_dims = [input_dim] + list(encoder_dims) + [embedding_dim]
    dec_dims = [embedding_dim] + list(decoder_dims) + [input_dim]

    def init_layer(k, d_in, d_out):
        k1, k2, k3 = jax.random.split(k, 3)
        scale = 1.0 / jnp.sqrt(jnp.float32(d_in))
        w_rel = jax.random.uniform(k1, (d_in, d_out), jnp.float32, -scale, scale)
        w_root = jax.random.uniform(k2, (d_in, d_out), jnp.float32, -scale, scale)
        b = jax.random.uniform(k3, (1, d_out), jnp.float32, -scale, scale)
        return dict(w_rel=w_rel, w_root=w_root, b=b)

    params = dict(encoder=[], decoder=[])
    for i in range(len(enc_dims) - 1):
        key, sub = jax.random.split(key)
        params["encoder"].append(init_layer(sub, enc_dims[i], enc_dims[i + 1]))
    for i in range(len(dec_dims) - 1):
        key, sub = jax.random.split(key)
        params["decoder"].append(init_layer(sub, dec_dims[i], dec_dims[i + 1]))
    return params


def pack_sdne_params(params, dp=DP):
    """Zero-pad to 128 lanes, stack (W_rel, W_root) per layer, cast to bf16."""
    layers = params["encoder"] + params["decoder"]
    n_layers = len(layers)
    w_stack = jnp.zeros((n_layers, 2, dp, dp), jnp.float32)
    b_stack = jnp.zeros((n_layers, 1, dp), jnp.float32)
    for idx, lay in enumerate(layers):
        d_in, d_out = lay["w_rel"].shape
        w_stack = w_stack.at[idx, 0, :d_in, :d_out].set(lay["w_rel"])
        w_stack = w_stack.at[idx, 1, :d_in, :d_out].set(lay["w_root"])
        b_stack = b_stack.at[idx, 0, :d_out].set(lay["b"][0])
    return dict(
        w=w_stack.astype(jnp.bfloat16), b=b_stack,
        num_layers=n_layers,
        emb_layer=len(params["encoder"]) - 1,
        input_dim=params["encoder"][0]["w_rel"].shape[0],
        embedding_dim=params["encoder"][-1]["w_rel"].shape[1],
    )


def sdne_forward(packed, x, adj, dp=DP):
    """Returns (reconstruction, embedding) matching SDNE.forward."""
    n, d_in = x.shape
    n_layers = packed["num_layers"]
    emb_layer = packed["emb_layer"]
    n_pad, tm, tk = _choose_tiles(n)

    x_pad = (jnp.zeros((n_pad, dp), jnp.float32)
             .at[:n, :d_in].set(x).astype(jnp.bfloat16))
    adj_pad = jnp.zeros((n_pad, n_pad), jnp.float32).at[:n, :n].set(adj)
    # int8 adjacency halves the dominant HBM stream; exact for the 0/1
    # (small-integer) edge weights GraphConv gets from a bare edge_index.
    # TODO(synk): general float edge_weight needs a bf16/f32 adjacency path.
    adj_i8 = adj_pad.astype(jnp.int8)

    kernel = functools.partial(
        sdne_fused_kernel,
        n_layers=n_layers, emb_layer=emb_layer, tm=tm, tk=tk)

    grid = (n_layers, n_pad // tm, n_pad // tk)

    recon_pad, emb_pad = pl.pallas_call(
        kernel,
        out_shape=(jax.ShapeDtypeStruct((n_pad, dp), jnp.float32),
                   jax.ShapeDtypeStruct((n_pad, dp), jnp.float32)),
        grid_spec=pltpu.PrefetchScalarGridSpec(
            num_scalar_prefetch=0,
            grid=grid,
            in_specs=[
                # int8 adjacency tiles; for n <= 2048 the block is the full
                # array (constant effective index) -> VMEM-resident across
                # all layers, no per-layer HBM re-read.
                pl.BlockSpec((tm, tk), lambda l, i, k: (i, k)),
                # padded bf16 node features (fetched once, stays resident)
                pl.BlockSpec((n_pad, dp), lambda l, i, k: (0, 0)),
                # stacked (W_rel, W_root) per layer, bf16
                pl.BlockSpec((1, 2, dp, dp), lambda l, i, k: (l, 0, 0, 0)),
                # bias per layer, f32
                pl.BlockSpec((1, 1, dp), lambda l, i, k: (l, 0, 0)),
            ],
            out_specs=[
                # resident lane-dense outputs, flushed once at grid end
                pl.BlockSpec((n_pad, dp), lambda l, i, k: (0, 0)),
                pl.BlockSpec((n_pad, dp), lambda l, i, k: (0, 0)),
            ],
            scratch_shapes=[
                pltpu.VMEM((2, n_pad, dp), jnp.bfloat16),  # H ping-pong planes
                pltpu.VMEM((tm, dp), jnp.float32),         # aggregation accum
            ],
        ),
        compiler_params=pltpu.CompilerParams(
            # Row-tile axis must stay serial: layer l+1 reads every row tile
            # of layer l through the per-core VMEM scratch.
            dimension_semantics=("arbitrary", "arbitrary", "arbitrary"),
            vmem_limit_bytes=_vmem_limit_bytes(),
        ),
    )(adj_i8, x_pad, packed["w"], packed["b"])

    recon = recon_pad[:n, :packed["input_dim"]]
    emb = emb_pad[:n, :packed["embedding_dim"]]
    return recon, emb


# ---------------------------------------------------------------------------
# Pure-JAX reference (f32 dense, layer by layer) for a correctness check.
# ---------------------------------------------------------------------------
def sdne_forward_ref(params, x, adj):
    def layer(h, lay):
        out = (adj @ h) @ lay["w_rel"] + h @ lay["w_root"] + lay["b"]
        return jnp.where(out >= 0.0, out, NEG_SLOPE * out)

    h = x
    for lay in params["encoder"]:
        h = layer(h, lay)
    emb = h
    for lay in params["decoder"]:
        h = layer(h, lay)
    return h, emb


# ---------------------------------------------------------------------------
# Main
# ---------------------------------------------------------------------------
if __name__ == "__main__":
    key = jax.random.PRNGKey(0)

    # Small graph: N nodes, ring topology (both directions).
    N = 16
    INPUT_DIM = 8
    ENCODER_DIMS = [16]
    EMBEDDING_DIM = 8
    DECODER_DIMS = [16]

    src = jnp.arange(N, dtype=jnp.int32)
    dst = (src + 1) % N
    edge_src = jnp.concatenate([src, dst])   # edge_index[0]
    edge_dst = jnp.concatenate([dst, src])   # edge_index[1]

    # Dense adjacency: A[dst, src] = 1 (sum aggregation over incoming edges).
    adj = jnp.zeros((N, N), jnp.float32).at[edge_dst, edge_src].add(1.0)

    key, kx, kp = jax.random.split(key, 3)
    x = jax.random.normal(kx, (N, INPUT_DIM), jnp.float32)
    params = init_sdne_params(kp, INPUT_DIM, ENCODER_DIMS,
                              EMBEDDING_DIM, DECODER_DIMS)
    packed = pack_sdne_params(params)

    recon, emb = sdne_forward(packed, x, adj)
    recon = jax.block_until_ready(recon)
    emb = jax.block_until_ready(emb)

    recon_ref, emb_ref = sdne_forward_ref(params, x, adj)

    assert recon.shape == (N, INPUT_DIM)
    assert emb.shape == (N, EMBEDDING_DIM)
    # bf16 weights/activations on the MXU path vs an f32 reference: tolerance
    # loosened accordingly (deliberate precision/perf tradeoff from review).
    assert jnp.allclose(recon, recon_ref, atol=5e-2, rtol=5e-2), (
        float(jnp.max(jnp.abs(recon - recon_ref))))
    assert jnp.allclose(emb, emb_ref, atol=5e-2, rtol=5e-2), (
        float(jnp.max(jnp.abs(emb - emb_ref))))

    # TODO(synk): SDNE.loss (Laplacian 1st-order + MSE) is training-only and
    # not part of forward(); omitted.
    print("KERNEL_OK")
</pallas_src>

<mosaic_0001>
module attributes {stable_mosaic.version = 11 : i64} {
  func.func @sdne_fused_kernel(%arg0: i32, %arg1: i32, %arg2: i32, %arg3: memref<128x128xi8, #tpu.memory_space<vmem>>, %arg4: memref<128x128xbf16, #tpu.memory_space<vmem>>, %arg5: memref<1x2x128x128xbf16, #tpu.memory_space<vmem>>, %arg6: memref<1x1x128xf32, #tpu.memory_space<vmem>>, %arg7: memref<128x128xf32, #tpu.memory_space<vmem>>, %arg8: memref<128x128xf32, #tpu.memory_space<vmem>>, %arg9: memref<2x128x128xbf16, #tpu.memory_space<vmem>>, %arg10: memref<128x128xf32, #tpu.memory_space<vmem>>) attributes {dimension_semantics = [#tpu.dimension_semantics<arbitrary>, #tpu.dimension_semantics<arbitrary>, #tpu.dimension_semantics<arbitrary>], iteration_bounds = array<i64: 4, 1, 1>, scalar_prefetch = 0 : i64, scratch_operands = 2 : i64, tpu.core_type = #tpu.core_type<tc>, window_params = [{transform_indices = @transform_0, window_bounds = array<i64: 128, 128>}, {pipeline_mode = #tpu.pipeline_mode<synchronous>, transform_indices = @transform_1, window_bounds = array<i64: 128, 128>}, {transform_indices = @transform_2, window_bounds = array<i64: 1, 2, 128, 128>}, {transform_indices = @transform_3, window_bounds = array<i64: 1, 1, 128>}, {pipeline_mode = #tpu.pipeline_mode<synchronous>, transform_indices = @transform_4, window_bounds = array<i64: 128, 128>}, {pipeline_mode = #tpu.pipeline_mode<synchronous>, transform_indices = @transform_5, window_bounds = array<i64: 128, 128>}]} {
    %c2_i32 = arith.constant 2 : i32
    %c0_i32 = arith.constant 0 : i32
    %0 = arith.cmpi eq, %c2_i32, %c0_i32 : i32
    %c1_i32 = arith.constant 1 : i32
    %1 = arith.select %0, %c1_i32, %c2_i32 : i32
    %2 = arith.remsi %arg0, %1 : i32
    %c0_i32_0 = arith.constant 0 : i32
    %3 = arith.cmpi ne, %2, %c0_i32_0 : i32
    %c0_i32_1 = arith.constant 0 : i32
    %4 = arith.cmpi slt, %2, %c0_i32_1 : i32
    %c0_i32_2 = arith.constant 0 : i32
    %5 = arith.cmpi slt, %1, %c0_i32_2 : i32
    %6 = arith.xori %4, %5 : i1
    %7 = arith.andi %6, %3 : i1
    %8 = arith.addi %2, %1 : i32
    %9 = arith.select %7, %8, %2 : i32
    %c1_i32_3 = arith.constant 1 : i32
    %10 = arith.addi %arg0, %c1_i32_3 : i32
    %c2_i32_4 = arith.constant 2 : i32
    %c0_i32_5 = arith.constant 0 : i32
    %11 = arith.cmpi eq, %c2_i32_4, %c0_i32_5 : i32
    %c1_i32_6 = arith.constant 1 : i32
    %12 = arith.select %11, %c1_i32_6, %c2_i32_4 : i32
    %13 = arith.remsi %10, %12 : i32
    %c0_i32_7 = arith.constant 0 : i32
    %14 = arith.cmpi ne, %13, %c0_i32_7 : i32
    %c0_i32_8 = arith.constant 0 : i32
    %15 = arith.cmpi slt, %13, %c0_i32_8 : i32
    %c0_i32_9 = arith.constant 0 : i32
    %16 = arith.cmpi slt, %12, %c0_i32_9 : i32
    %17 = arith.xori %15, %16 : i1
    %18 = arith.andi %17, %14 : i1
    %19 = arith.addi %13, %12 : i32
    %20 = arith.select %18, %19, %13 : i32
    %c0_i32_10 = arith.constant 0 : i32
    %21 = arith.cmpi eq, %arg0, %c0_i32_10 : i32
    %c0_i32_11 = arith.constant 0 : i32
    %22 = arith.cmpi eq, %arg1, %c0_i32_11 : i32
    %23 = arith.andi %21, %22 : i1
    %c0_i32_12 = arith.constant 0 : i32
    %24 = arith.cmpi eq, %arg2, %c0_i32_12 : i32
    %25 = arith.andi %23, %24 : i1
    %26 = arith.extui %25 : i1 to i32
    %c0_i32_13 = arith.constant 0 : i32
    %27 = arith.cmpi ne, %26, %c0_i32_13 : i32
    scf.if %27 {
      %c0_24 = arith.constant 0 : index
      %c0_25 = arith.constant 0 : index
      %46 = vector.load %arg4[%c0_24, %c0_25] : memref<128x128xbf16, #tpu.memory_space<vmem>>, vector<128x128xbf16>
      %c0_26 = arith.constant 0 : index
      %c0_27 = arith.constant 0 : index
      %c0_28 = arith.constant 0 : index
      %47 = vector.load %arg9[%c0_26, %c0_27, %c0_28] : memref<2x128x128xbf16, #tpu.memory_space<vmem>>, vector<1x128x128xbf16>
      %48 = vector.shape_cast %47 : vector<1x128x128xbf16> to vector<128x128xbf16>
      %49 = vector.shape_cast %46 : vector<128x128xbf16> to vector<1x128x128xbf16>
      tpu.vector_store %arg9[%c0_26, %c0_27, %c0_28], %49 {strides = array<i32>} : memref<2x128x128xbf16, #tpu.memory_space<vmem>>, vector<1x128x128xbf16>,
    } else {
    }
    %c0_i32_14 = arith.constant 0 : i32
    %28 = arith.cmpi eq, %arg2, %c0_i32_14 : i32
    %29 = arith.extui %28 : i1 to i32
    %c0_i32_15 = arith.constant 0 : i32
    %30 = arith.cmpi ne, %29, %c0_i32_15 : i32
    scf.if %30 {
      %cst_24 = arith.constant 0.000000e+00 : f32
      %46 = vector.broadcast %cst_24 : f32 to vector<128x128xf32>
      %c0_25 = arith.constant 0 : index
      %c0_26 = arith.constant 0 : index
      %47 = vector.load %arg10[%c0_25, %c0_26] : memref<128x128xf32, #tpu.memory_space<vmem>>, vector<128x128xf32>
      tpu.vector_store %arg10[%c0_25, %c0_26], %46 {strides = array<i32>} : memref<128x128xf32, #tpu.memory_space<vmem>>, vector<128x128xf32>,
    } else {
    }
    %c128_i32 = arith.constant 128 : i32
    %31 = arith.muli %arg2, %c128_i32 : i32
    %32 = tpu.assume_multiple %31, 128 : i32
    %33 = arith.index_cast %9 : i32 to index
    %34 = arith.index_cast %32 : i32 to index
    %c0 = arith.constant 0 : index
    %35 = vector.load %arg9[%33, %34, %c0] : memref<2x128x128xbf16, #tpu.memory_space<vmem>>, vector<1x128x128xbf16>
    %36 = vector.shape_cast %35 : vector<1x128x128xbf16> to vector<128x128xbf16>
    %c0_16 = arith.constant 0 : index
    %c0_17 = arith.constant 0 : index
    %37 = vector.load %arg10[%c0_16, %c0_17] : memref<128x128xf32, #tpu.memory_space<vmem>>, vector<128x128xf32>
    %c0_18 = arith.constant 0 : index
    %c0_19 = arith.constant 0 : index
    %38 = vector.load %arg3[%c0_18, %c0_19] : memref<128x128xi8, #tpu.memory_space<vmem>>, vector<128x128xi8>
    %39 = arith.sitofp %38 : vector<128x128xi8> to vector<128x128xbf16>
    %cst = arith.constant dense<0.000000e+00> : vector<128x128xf32>
    %40 = tpu.matmul %39, %36, %cst {dimension_numbers = #tpu.dot_dimension_numbers<[1], [0], [0], [1], [0, 0, 1, 1], [], []>} : vector<128x128xbf16>, vector<128x128xbf16>, vector<128x128xf32> -> vector<128x128xf32>
    %41 = arith.addf %37, %40 : vector<128x128xf32>
    %c0_20 = arith.constant 0 : index
    %c0_21 = arith.constant 0 : index
    %42 = vector.load %arg10[%c0_20, %c0_21] : memref<128x128xf32, #tpu.memory_space<vmem>>, vector<128x128xf32>
    tpu.vector_store %arg10[%c0_20, %c0_21], %41 {strides = array<i32>} : memref<128x128xf32, #tpu.memory_space<vmem>>, vector<128x128xf32>,
    %c0_i32_22 = arith.constant 0 : i32
    %43 = arith.cmpi eq, %arg2, %c0_i32_22 : i32
    %44 = arith.extui %43 : i1 to i32
    %c0_i32_23 = arith.constant 0 : i32
    %45 = arith.cmpi ne, %44, %c0_i32_23 : i32
    scf.if %45 {
      %c128_i32_24 = arith.constant 128 : i32
      %46 = arith.muli %arg1, %c128_i32_24 : i32
      %47 = tpu.assume_multiple %46, 128 : i32
      %48 = arith.index_cast %9 : i32 to index
      %49 = arith.index_cast %47 : i32 to index
      %c0_25 = arith.constant 0 : index
      %50 = vector.load %arg9[%48, %49, %c0_25] : memref<2x128x128xbf16, #tpu.memory_space<vmem>>, vector<1x128x128xbf16>
      %51 = vector.shape_cast %50 : vector<1x128x128xbf16> to vector<128x128xbf16>
      %c0_26 = arith.constant 0 : index
      %c0_27 = arith.constant 0 : index
      %52 = vector.load %arg10[%c0_26, %c0_27] : memref<128x128xf32, #tpu.memory_space<vmem>>, vector<128x128xf32>
      %53 = arith.truncf %52 : vector<128x128xf32> to vector<128x128xbf16>
      %c0_28 = arith.constant 0 : index
      %c0_29 = arith.constant 0 : index
      %c0_30 = arith.constant 0 : index
      %c0_31 = arith.constant 0 : index
      %54 = vector.load %arg5[%c0_28, %c0_29, %c0_30, %c0_31] : memref<1x2x128x128xbf16, #tpu.memory_space<vmem>>, vector<1x1x128x128xbf16>
      %55 = vector.shape_cast %54 : vector<1x1x128x128xbf16> to vector<128x128xbf16>
      %cst_32 = arith.constant dense<0.000000e+00> : vector<128x128xf32>
      %56 = tpu.matmul %53, %55, %cst_32 {dimension_numbers = #tpu.dot_dimension_numbers<[1], [0], [0], [1], [0, 0, 1, 1], [], []>} : vector<128x128xbf16>, vector<128x128xbf16>, vector<128x128xf32> -> vector<128x128xf32>
      %c0_33 = arith.constant 0 : index
      %c1 = arith.constant 1 : index
      %c0_34 = arith.constant 0 : index
      %c0_35 = arith.constant 0 : index
      %57 = vector.load %arg5[%c0_33, %c1, %c0_34, %c0_35] : memref<1x2x128x128xbf16, #tpu.memory_space<vmem>>, vector<1x1x128x128xbf16>
      %58 = vector.shape_cast %57 : vector<1x1x128x128xbf16> to vector<128x128xbf16>
      %cst_36 = arith.constant dense<0.000000e+00> : vector<128x128xf32>
      %59 = tpu.matmul %51, %58, %cst_36 {dimension_numbers = #tpu.dot_dimension_numbers<[1], [0], [0], [1], [0, 0, 1, 1], [], []>} : vector<128x128xbf16>, vector<128x128xbf16>, vector<128x128xf32> -> vector<128x128xf32>
      %60 = arith.addf %56, %59 : vector<128x128xf32>
      %c0_37 = arith.constant 0 : index
      %c0_38 = arith.constant 0 : index
      %c0_39 = arith.constant 0 : index
      %61 = vector.load %arg6[%c0_37, %c0_38, %c0_39] : memref<1x1x128xf32, #tpu.memory_space<vmem>>, vector<1x1x128xf32>
      %62 = vector.shape_cast %61 : vector<1x1x128xf32> to vector<1x128xf32>
      %63 = vector.broadcast %62 : vector<1x128xf32> to vector<128x128xf32>
      %64 = arith.addf %60, %63 : vector<128x128xf32>
      %cst_40 = arith.constant 0.000000e+00 : f32
      %65 = vector.broadcast %cst_40 : f32 to vector<128x128xf32>
      %66 = arith.cmpf oge, %64, %65 : vector<128x128xf32>
      %cst_41 = arith.constant 0.00999999977 : f32
      %67 = vector.broadcast %cst_41 : f32 to vector<128x128xf32>
      %68 = arith.mulf %67, %64 : vector<128x128xf32>
      %69 = arith.select %66, %64, %68 : vector<128x128xi1>, vector<128x128xf32>
      %70 = arith.truncf %69 : vector<128x128xf32> to vector<128x128xbf16>
      %71 = arith.index_cast %20 : i32 to index
      %72 = arith.index_cast %47 : i32 to index
      %c0_42 = arith.constant 0 : index
      %73 = vector.load %arg9[%71, %72, %c0_42] : memref<2x128x128xbf16, #tpu.memory_space<vmem>>, vector<1x128x128xbf16>
      %74 = vector.shape_cast %73 : vector<1x128x128xbf16> to vector<128x128xbf16>
      %75 = vector.shape_cast %70 : vector<128x128xbf16> to vector<1x128x128xbf16>
      tpu.vector_store %arg9[%71, %72, %c0_42], %75 {strides = array<i32>} : memref<2x128x128xbf16, #tpu.memory_space<vmem>>, vector<1x128x128xbf16>,
      %c1_i32_43 = arith.constant 1 : i32
      %76 = arith.cmpi eq, %arg0, %c1_i32_43 : i32
      %77 = arith.extui %76 : i1 to i32
      %c0_i32_44 = arith.constant 0 : i32
      %78 = arith.cmpi ne, %77, %c0_i32_44 : i32
      scf.if %78 {
        %82 = arith.index_cast %47 : i32 to index
        %c0_46 = arith.constant 0 : index
        %83 = vector.load %arg8[%82, %c0_46] : memref<128x128xf32, #tpu.memory_space<vmem>>, vector<128x128xf32>
        tpu.vector_store %arg8[%82, %c0_46], %69 {strides = array<i32>} : memref<128x128xf32, #tpu.memory_space<vmem>>, vector<128x128xf32>,
      } else {
      }
      %c3_i32 = arith.constant 3 : i32
      %79 = arith.cmpi eq, %arg0, %c3_i32 : i32
      %80 = arith.extui %79 : i1 to i32
      %c0_i32_45 = arith.constant 0 : i32
      %81 = arith.cmpi ne, %80, %c0_i32_45 : i32
      scf.if %81 {
        %82 = arith.index_cast %47 : i32 to index
        %c0_46 = arith.constant 0 : index
        %83 = vector.load %arg7[%82, %c0_46] : memref<128x128xf32, #tpu.memory_space<vmem>>, vector<128x128xf32>
        tpu.vector_store %arg7[%82, %c0_46], %69 {strides = array<i32>} : memref<128x128xf32, #tpu.memory_space<vmem>>, vector<128x128xf32>,
      } else {
      }
    } else {
    }
    return
  }
  func.func @transform_0(%arg0: i32, %arg1: i32, %arg2: i32) -> (i32, i32) {
    %c0_i32 = arith.constant 0 : i32
    return %arg1, %arg2 : i32, i32
  }
  func.func @transform_1(%arg0: i32, %arg1: i32, %arg2: i32) -> (i32, i32) {
    %c0_i32 = arith.constant 0 : i32
    %c0_i32_0 = arith.constant 0 : i32
    %c0_i32_1 = arith.constant 0 : i32
    return %c0_i32, %c0_i32_0 : i32, i32
  }
  func.func @transform_2(%arg0: i32, %arg1: i32, %arg2: i32) -> (i32, i32, i32, i32) {
    %c0_i32 = arith.constant 0 : i32
    %c0_i32_0 = arith.constant 0 : i32
    %c0_i32_1 = arith.constant 0 : i32
    %c0_i32_2 = arith.constant 0 : i32
    return %arg0, %c0_i32, %c0_i32_0, %c0_i32_1 : i32, i32, i32, i32
  }
  func.func @transform_3(%arg0: i32, %arg1: i32, %arg2: i32) -> (i32, i32, i32) {
    %c0_i32 = arith.constant 0 : i32
    %c0_i32_0 = arith.constant 0 : i32
    %c0_i32_1 = arith.constant 0 : i32
    return %arg0, %c0_i32, %c0_i32_0 : i32, i32, i32
  }
  func.func @transform_4(%arg0: i32, %arg1: i32, %arg2: i32) -> (i32, i32) {
    %c0_i32 = arith.constant 0 : i32
    %c0_i32_0 = arith.constant 0 : i32
    %c0_i32_1 = arith.constant 0 : i32
    return %c0_i32, %c0_i32_0 : i32, i32
  }
  func.func @transform_5(%arg0: i32, %arg1: i32, %arg2: i32) -> (i32, i32) {
    %c0_i32 = arith.constant 0 : i32
    %c0_i32_0 = arith.constant 0 : i32
    %c0_i32_1 = arith.constant 0 : i32
    return %c0_i32, %c0_i32_0 : i32, i32
  }
}

</mosaic_0001>

<llo_original>
// kernel: tpu_custom_call.1
$region0: #{tpu_custom_call.1}
  #allocation0 [shape = 'u32[]', space=smem, size = 0x4, offset = 0x4, fixed_abs, tag = 'smem constant byte address 0x4 - core index']
  #allocation1 [shape = 'u32[144,128]{1,0:T(1,128)}', space=vmem, size = 0x12000, scoped, tag = 'internal scratch']
  #allocation2 [shape = 'bf16[2,128,128]{2,1,0:T(8,128)(2,1)}', space=vmem, size = 0x10000, scoped, tag = 'scratch operand']
  #allocation3 [shape = 'f32[128,128]{1,0:T(8,128)}', space=vmem, size = 0x10000, scoped, tag = 'scratch operand']
  %s0 = inlined_call_operand.hbm [shape: s8[128,128], index: 0, kind: input, shape index: {}]
  %s1 = inlined_call_operand.hbm [shape: bf16[128,128], index: 1, kind: input, shape index: {}]
  %s2 = inlined_call_operand.hbm [shape: bf16[4,2,128,128], index: 2, kind: input, shape index: {}]
  %s3 = inlined_call_operand.vmem [shape: f32[4,1,128], index: 3, kind: input, shape index: {}]
  %s4 = inlined_call_operand.hbm [shape: f32[128,128], index: 4, kind: output, shape index: {0}]
  %s5 = inlined_call_operand.hbm [shape: f32[128,128], index: 5, kind: output, shape index: {1}]
  %6 = xla_tuple %s4, %s5
  %s7 = sld [smem:[#allocation0]]
  $region89: #{tpu_custom_call.1} parent=0
    _
  %s9 = ssub.s32 1, %s7
  %s10 = scalar_select 0, %s9, %s7
  $region1: #{tpu_custom_call.1} parent=0
    #allocation4 [shape = 'u8[16384]{0}', space=vmem, size = 0x4000, scoped, tag = 'input window, operand 0, single buffered']
    #allocation5 [shape = 's32[2]{0}', space=sflag, size = 0x8, scoped, tag = 'scoped memory for tpu_custom_call.1']
    #allocation6 [shape = 's32[2]{0}', space=sflag, size = 0x8, scoped, tag = 'scoped memory for tpu_custom_call.1']
    #allocation7 [shape = 'u8[32768]{0}', space=vmem, size = 0x8000, scoped, tag = 'input window, operand 1, single buffered']
    #allocation8 [shape = 's32[1]{0}', space=sflag, size = 0x4, scoped, tag = 'scoped memory for tpu_custom_call.1']
    #allocation9 [shape = 'u8[131072]{0}', space=vmem, size = 0x20000, scoped, tag = 'input window, operand 2']
    #allocation10 [shape = 'u8[65536]{0}', space=vmem, size = 0x10000, scoped, tag = 'output window, operand 0, single buffered']
    #allocation11 [shape = 'u8[65536]{0}', space=vmem, size = 0x10000, scoped, tag = 'output window, operand 1, single buffered']
    #allocation12 [shape = 's32[1]{0}', space=sflag, size = 0x4, scoped, tag = 'scoped memory for tpu_custom_call.1']
    %11 = vsyncpa [#allocation5], 0
    %12 = vsyncpa [#allocation8], 0
    %13 = vsyncpa [#allocation6], 0
    %14 = vsyncpa [#allocation12], 0
    loop: start=0, step=1, limit=6
    $region2: #{tpu_custom_call.1} parent=1 // loop_pre_header
      _
    $region3: #{tpu_custom_call.1} parent=1 // loop_header
      %s16 = sphi 0, %s20
      %p17 = scmp.ge.s32.totalorder %s16, 6
      %s23 = sphi 0, %s42
      %s24 = sphi 0, %s38
      %s25 = sphi 0, %s34
      %s26 = sphi 0, %s23
      %s27 = sphi 0, %s24
      %s28 = sphi 0, %s25
      %s29 = sphi 0, %s26
      %s30 = sphi 0, %s27
      %s31 = sphi 0, %s28
      %s47 = sphi 0, %s49
      %s50 = sphi 0, %s47
      %s51 = sphi 0, %s50
      %s67 = sphi 0, %s51
      %s71 = sphi 0, %s71
      %s73 = sphi 0, %s71
      %s74 = sphi 0, %s73
      %s88 = sphi 0, %s74
      %s94 = sphi 0, %s96
      %s97 = sphi 0, %s94
      %s98 = sphi 0, %s97
      %s114 = sphi 0, %s98
      %s120 = sphi 0, %s122
      %s123 = sphi 0, %s120
      %s124 = sphi 0, %s123
      %s140 = sphi 0, %s124
      %s144 = sphi 0, %s144
      %s146 = sphi 0, %s144
      %s147 = sphi 0, %s146
      %s161 = sphi 0, %s147
      %s165 = sphi 0, %s165
      %s167 = sphi 0, %s165
      %s168 = sphi 0, %s167
      %s182 = sphi 0, %s168
    $region4: #{tpu_custom_call.1} parent=1 // loop_header_branch
      %19 = sbr.rel (%p17) target = $region8
    $region5: #{tpu_custom_call.1} parent=1 // loop_body
      %s21 = ssub.s32 %s16, 1
      %s22 = ssub.s32 %s16, 2
      %s32 = sadd.s32 1, %s25
      %p33 = scmp.ge.s32.totalorder %s32, 1
      %s34 = scalar_select %p33, 0, %s32
      %s35 = sadd.s32 1, %s24
      %s36 = scalar_select %p33, %s35, %s24
      %p37 = scmp.ge.s32.totalorder %s36, 1
      %s38 = scalar_select %p37, 0, %s36
      %s39 = sadd.s32 1, %s23
      %s40 = scalar_select %p37, %s39, %s23
      %p41 = scmp.ge.s32.totalorder %s40, 4
      %s42 = scalar_select %p41, 0, %s40
      %s43 = ssub.s32 %s24, %s38
      %s44 = ssub.s32 %s25, %s34
      %s45 = sor.u32 %s43, %s44
      %p46 = scmp.eq.s32.totalorder %s45, 0
      %s48 = sadd.s32 %s47, 1
      %s49 = scalar_select %p46, %s47, %s48
      %p52 = pneg %p46
      %p53 = scmp.eq.s32.totalorder %s16, 3
      %p54 = por %p52, %p53
      %p55 = scmp.ne.s32.totalorder %s47, %s50
      %p56 = scmp.eq.s32.totalorder %s16, 0
      %p57 = por %p55, %p56
      %p58 = scmp.ne.s32.totalorder %s47, %s50
      %p59 = scmp.eq.s32.totalorder %s21, 3
      %p60 = por %p58, %p59
      %p61 = scmp.ne.s32.totalorder %s50, %s51
      %p62 = scmp.eq.s32.totalorder %s21, 0
      %p63 = por %p61, %p62
      %p64 = scmp.ne.s32.totalorder %s50, %s51
      %p65 = scmp.eq.s32.totalorder %s22, 3
      %p66 = por %p64, %p65
      %p68 = scmp.ne.s32.totalorder %s51, %s67
      %p69 = scmp.eq.s32.totalorder %s22, 0
      %p70 = por %p68, %p69
      %s72 = sadd.s32 %s71, 1
      %p75 = scmp.eq.s32.totalorder %s16, 3
      %p76 = scmp.ne.s32.totalorder %s71, %s73
      %p77 = scmp.eq.s32.totalorder %s16, 0
      %p78 = por %p76, %p77
      %p79 = scmp.ne.s32.totalorder %s71, %s73
      %p80 = scmp.eq.s32.totalorder %s21, 3
      %p81 = por %p79, %p80
      %p82 = scmp.ne.s32.totalorder %s73, %s74
      %p83 = scmp.eq.s32.totalorder %s21, 0
      %p84 = por %p82, %p83
      %p85 = scmp.ne.s32.totalorder %s73, %s74
      %p86 = scmp.eq.s32.totalorder %s22, 3
      %p87 = por %p85, %p86
      %p89 = scmp.ne.s32.totalorder %s74, %s88
      %p90 = scmp.eq.s32.totalorder %s22, 0
      %p91 = por %p89, %p90
      %s92 = ssub.s32 %s23, %s42
      %p93 = scmp.eq.s32.totalorder %s92, 0
      %s95 = sadd.s32 %s94, 1
      %s96 = scalar_select %p93, %s94, %s95
      %p99 = pneg %p93
      %p100 = scmp.eq.s32.totalorder %s16, 3
      %p101 = por %p99, %p100
      %p102 = scmp.ne.s32.totalorder %s94, %s97
      %p103 = scmp.eq.s32.totalorder %s16, 0
      %p104 = por %p102, %p103
      %p105 = scmp.ne.s32.totalorder %s94, %s97
      %p106 = scmp.eq.s32.totalorder %s21, 3
      %p107 = por %p105, %p106
      %p108 = scmp.ne.s32.totalorder %s97, %s98
      %p109 = scmp.eq.s32.totalorder %s21, 0
      %p110 = por %p108, %p109
      %p111 = scmp.ne.s32.totalorder %s97, %s98
      %p112 = scmp.eq.s32.totalorder %s22, 3
      %p113 = por %p111, %p112
      %p115 = scmp.ne.s32.totalorder %s98, %s114
      %p116 = scmp.eq.s32.totalorder %s22, 0
      %p117 = por %p115, %p116
      %s118 = ssub.s32 %s23, %s42
      %p119 = scmp.eq.s32.totalorder %s118, 0
      %s121 = sadd.s32 %s120, 1
      %s122 = scalar_select %p119, %s120, %s121
      %p125 = pneg %p119
      %p126 = scmp.eq.s32.totalorder %s16, 3
      %p127 = por %p125, %p126
      %p128 = scmp.ne.s32.totalorder %s120, %s123
      %p129 = scmp.eq.s32.totalorder %s16, 0
      %p130 = por %p128, %p129
      %p131 = scmp.ne.s32.totalorder %s120, %s123
      %p132 = scmp.eq.s32.totalorder %s21, 3
      %p133 = por %p131, %p132
      %p134 = scmp.ne.s32.totalorder %s123, %s124
      %p135 = scmp.eq.s32.totalorder %s21, 0
      %p136 = por %p134, %p135
      %p137 = scmp.ne.s32.totalorder %s123, %s124
      %p138 = scmp.eq.s32.totalorder %s22, 3
      %p139 = por %p137, %p138
      %p141 = scmp.ne.s32.totalorder %s124, %s140
      %p142 = scmp.eq.s32.totalorder %s22, 0
      %p143 = por %p141, %p142
      %s145 = sadd.s32 %s144, 1
      %p148 = scmp.eq.s32.totalorder %s16, 3
      %p149 = scmp.ne.s32.totalorder %s144, %s146
      %p150 = scmp.eq.s32.totalorder %s16, 0
      %p151 = por %p149, %p150
      %p152 = scmp.ne.s32.totalorder %s144, %s146
      %p153 = scmp.eq.s32.totalorder %s21, 3
      %p154 = por %p152, %p153
      %p155 = scmp.ne.s32.totalorder %s146, %s147
      %p156 = scmp.eq.s32.totalorder %s21, 0
      %p157 = por %p155, %p156
      %p158 = scmp.ne.s32.totalorder %s146, %s147
      %p159 = scmp.eq.s32.totalorder %s22, 3
      %p160 = por %p158, %p159
      %p162 = scmp.ne.s32.totalorder %s147, %s161
      %p163 = scmp.eq.s32.totalorder %s22, 0
      %p164 = por %p162, %p163
      %s166 = sadd.s32 %s165, 1
      %p169 = scmp.eq.s32.totalorder %s16, 3
      %p170 = scmp.ne.s32.totalorder %s165, %s167
      %p171 = scmp.eq.s32.totalorder %s16, 0
      %p172 = por %p170, %p171
      %p173 = scmp.ne.s32.totalorder %s165, %s167
      %p174 = scmp.eq.s32.totalorder %s21, 3
      %p175 = por %p173, %p174
      %p176 = scmp.ne.s32.totalorder %s167, %s168
      %p177 = scmp.eq.s32.totalorder %s21, 0
      %p178 = por %p176, %p177
      %p179 = scmp.ne.s32.totalorder %s167, %s168
      %p180 = scmp.eq.s32.totalorder %s22, 3
      %p181 = por %p179, %p180
      %p183 = scmp.ne.s32.totalorder %s168, %s182
      %p184 = scmp.eq.s32.totalorder %s22, 0
      %p185 = por %p183, %p184
      %p186 = scmp.le.s32.totalorder 1, %s16
      %p187 = scmp.lt.s32.totalorder %s16, 5
      %p188 = pnand %p186, %p187
      %p189 = pneg %p188
      // Predicated region
      $region9: #{tpu_custom_call.1} parent=5 // pred_check
        _
      $region10: #{tpu_custom_call.1} parent=5 // pred_check_branch
        %191 = sbr.rel (%p188) target = $region12
      $region11: #{tpu_custom_call.1} parent=5 // pred_region
        %s192 = ssub.s32 %s16, 1
        // Predicated region
        $region13: #{tpu_custom_call.1} parent=11 // pred_check
          %p193 = pneg %p63
        $region14: #{tpu_custom_call.1} parent=11 // pred_check_branch
          %195 = sbr.rel (%p193) target = $region16
        $region15: #{tpu_custom_call.1} parent=11 // pred_region
          %s196 = smul.u32 4, %s27
          %s198 = ssub.s32 512, 512
          %199 = vsyncadd [#allocation5], %s198
          %s200 = sadd.s32 %s28, %s196
          %s201 = smul.addr %s200, 128
          %s202 = scalar_lea.hbm %s0, %s201
          %s203 = sshll.u32 [#allocation4], 4
          %s204 = int_to_ptr.vmem [resolvable:$true] %s203
          %209 = dma.hbm_to_vmem [thread:$0]  %s202, 512, %s204, [#allocation5], 128, 128, 8
        $region16: #{tpu_custom_call.1} parent=11 // pred_fallthru
          _
        // Predicated region
        $region17: #{tpu_custom_call.1} parent=11 // pred_check
          %p210 = pneg %p84
        $region18: #{tpu_custom_call.1} parent=11 // pred_check_branch
          %212 = sbr.rel (%p210) target = $region20
        $region19: #{tpu_custom_call.1} parent=11 // pred_region
          %s214 = ssub.s32 1024, 1024
          %215 = vsyncadd [#allocation8], %s214
          %s216 = sshll.u32 [#allocation7], 4
          %s217 = int_to_ptr.vmem [resolvable:$true] %s216
          %222 = dma.hbm_to_vmem [thread:$0]  %s1, 1024, %s217, [#allocation8], 64, 64, 4
        $region20: #{tpu_custom_call.1} parent=11 // pred_fallthru
          _
      $region12: #{tpu_custom_call.1} parent=5 // pred_fallthru
        _
      %p223 = scmp.lt.s32.totalorder %s16, 4
      // Predicated region
      $region21: #{tpu_custom_call.1} parent=5 // pred_check
        %p224 = pneg %p223
      $region22: #{tpu_custom_call.1} parent=5 // pred_check_branch
        %226 = sbr.rel (%p224) target = $region24
      $region23: #{tpu_custom_call.1} parent=5 // pred_region
        // Predicated region
        $region25: #{tpu_custom_call.1} parent=23 // pred_check
          %p227 = pneg %p104
        $region26: #{tpu_custom_call.1} parent=23 // pred_check_branch
          %229 = sbr.rel (%p227) target = $region28
        $region27: #{tpu_custom_call.1} parent=23 // pred_region
          %s230 = sand.u32 %s16, 1
          %s231 = scalar_lea.sflag [#allocation5], %s230
          %s232 = sand.u32 %s94, 1
          %s233 = smul.addr %s232, 128
          %s234 = scalar_lea.vmem [#allocation9], %s233
          %s236 = ssub.s32 2048, 2048
          %237 = vsyncadd %s231, %s236
          %s238 = smul.addr %s23, 32
          %s239 = smul.addr %s238, 64
          %s240 = scalar_lea.hbm %s2, %s239
          %s241 = sshll.u32 %s234, 4
          %s242 = int_to_ptr.vmem [resolvable:$true] %s241
          %247 = dma.hbm_to_vmem [thread:$0]  %s240, 2048, %s242, %s231, 64, 64, 4
        $region28: #{tpu_custom_call.1} parent=23 // pred_fallthru
          _
        // Predicated region
        $region29: #{tpu_custom_call.1} parent=23 // pred_check
          %p248 = pneg %p130
        $region30: #{tpu_custom_call.1} parent=23 // pred_check_branch
          %250 = sbr.rel (%p248) target = $region32
        $region31: #{tpu_custom_call.1} parent=23 // pred_region
          %p251 = scmp.lt.s32.totalorder %s23, 3
          %s252 = scalar_select %p251, %s23, 3
          %s253 = scalar_lea.vmem %s3, %s252
        $region32: #{tpu_custom_call.1} parent=23 // pred_fallthru
          _
      $region24: #{tpu_custom_call.1} parent=5 // pred_fallthru
        _
      %p254 = scmp.le.s32.totalorder 1, %s16
      %p255 = scmp.lt.s32.totalorder %s16, 5
      %p256 = pnand %p254, %p255
      %p257 = pneg %p256
      // Predicated region
      $region33: #{tpu_custom_call.1} parent=5 // pred_check
        _
      $region34: #{tpu_custom_call.1} parent=5 // pred_check_branch
        %259 = sbr.rel (%p256) target = $region36
      $region35: #{tpu_custom_call.1} parent=5 // pred_region
        %s260 = ssub.s32 %s16, 1
        // Predicated region
        $region37: #{tpu_custom_call.1} parent=35 // pred_check
          %p261 = pneg %p63
        $region38: #{tpu_custom_call.1} parent=35 // pred_check_branch
          %263 = sbr.rel (%p261) target = $region40
        $region39: #{tpu_custom_call.1} parent=35 // pred_region
          %264 = dma.done [#allocation5], 512
        $region40: #{tpu_custom_call.1} parent=35 // pred_fallthru
          _
        // Predicated region
        $region41: #{tpu_custom_call.1} parent=35 // pred_check
          %p265 = pneg %p84
        $region42: #{tpu_custom_call.1} parent=35 // pred_check_branch
          %267 = sbr.rel (%p265) target = $region44
        $region43: #{tpu_custom_call.1} parent=35 // pred_region
          %268 = dma.done [#allocation8], 1024
        $region44: #{tpu_custom_call.1} parent=35 // pred_fallthru
          _
        %s269 = sand.u32 %s21, 1
        %s270 = scalar_lea.sflag [#allocation5], %s269
        %s271 = sand.u32 %s97, 1
        %s272 = smul.addr %s271, 128
        %s273 = scalar_lea.vmem [#allocation9], %s272
        // Predicated region
        $region45: #{tpu_custom_call.1} parent=35 // pred_check
          %p274 = pneg %p110
        $region46: #{tpu_custom_call.1} parent=35 // pred_check_branch
          %276 = sbr.rel (%p274) target = $region48
        $region47: #{tpu_custom_call.1} parent=35 // pred_region
          %277 = dma.done %s270, 2048
        $region48: #{tpu_custom_call.1} parent=35 // pred_fallthru
          _
        %p278 = pneg %p63
        %p279 = pneg %p60
        %p280 = pneg %p84
        %p281 = pneg %p81
        %s282 = sand.u32 %s21, 1
        %s283 = scalar_lea.sflag [#allocation5], %s282
        %s284 = sand.u32 %s97, 1
        %s285 = smul.addr %s284, 128
        %s286 = scalar_lea.vmem [#allocation9], %s285
        %p287 = pneg %p110
        %p288 = pneg %p107
        %p289 = scmp.lt.s32.totalorder %s26, 3
        %s290 = scalar_select %p289, %s26, 3
        %s291 = scalar_lea.vmem %s3, %s290
        %p292 = pneg %p136
        %p293 = pneg %p133
        %p294 = pneg %p157
        %p295 = pneg %p154
        %p296 = pneg %p178
        %p297 = pneg %p175
        %s298 = smul.u32 4, %s27
        %p299 = scmp.lt.s32.totalorder %s26, 3
        %s300 = scalar_select %p299, %s26, 3
        %s301 = scalar_lea.vmem %s3, %s300
        %p303 = scmp.lt.s32.totalorder %s26, 0
        %s304 = ssub.s32 0, %s26
        %s305 = scalar_select %p303, %s304, %s26
        %s306 = sand.u32 %s305, 1
        %s307 = ssub.s32 0, %s306
        %s308 = scalar_select %p303, %s307, %s306
        %p309 = scmp.ne.s32.totalorder %s308, 0
        %p310 = scmp.lt.s32.totalorder %s308, 0
        %p311 = pnand %p310, %p309
        %p312 = pneg %p311
        %s313 = sadd.s32 %s308, 2
        %s314 = scalar_select %p312, %s313, %s308
        %s315 = sadd.s32 %s26, 1
        %p316 = scmp.lt.s32.totalorder %s315, 0
        %s317 = ssub.s32 0, %s315
        %s318 = scalar_select %p316, %s317, %s315
        %s319 = sand.u32 %s318, 1
        %s320 = ssub.s32 0, %s319
        %s321 = scalar_select %p316, %s320, %s319
        %p322 = scmp.ne.s32.totalorder %s321, 0
        %p323 = scmp.lt.s32.totalorder %s321, 0
        %p324 = pnand %p323, %p322
        %p325 = pneg %p324
        %s326 = sadd.s32 %s321, 2
        %s327 = scalar_select %p325, %s326, %s321
        %p328 = scmp.eq.s32.totalorder %s26, 0
        %p329 = scmp.eq.s32.totalorder %s27, 0
        %p330 = pnand %p328, %p329
        %p331 = pneg %p330
        %p332 = scmp.eq.s32.totalorder %s28, 0
        %p333 = pnand %p331, %p332
        %p334 = pneg %p333
        // Predicated region
        $region49: #{tpu_custom_call.1} parent=35 // pred_check
          _
        $region50: #{tpu_custom_call.1} parent=35 // pred_check_branch
          %336 = sbr.rel (%p333) target = $region52
        $region51: #{tpu_custom_call.1} parent=35 // pred_region
          %v337 = vld [vmem:[#allocation7] sm:$0xf]
          %v338 = vld [vmem:[#allocation7 + $0x4] sm:$0xf]
          %v339 = vld [vmem:[#allocation7 + $0x8] sm:$0xf]
          %v340 = vld [vmem:[#allocation7 + $0xc] sm:$0xf]
          %v341 = vld [vmem:[#allocation7 + $0x10] sm:$0xf]
          %v342 = vld [vmem:[#allocation7 + $0x14] sm:$0xf]
          %v343 = vld [vmem:[#allocation7 + $0x18] sm:$0xf]
          %v344 = vld [vmem:[#allocation7 + $0x1c] sm:$0xf]
          %v345 = vld [vmem:[#allocation7 + $0x20] sm:$0xf]
          %v346 = vld [vmem:[#allocation7 + $0x24] sm:$0xf]
          %v347 = vld [vmem:[#allocation7 + $0x28] sm:$0xf]
          %v348 = vld [vmem:[#allocation7 + $0x2c] sm:$0xf]
          %v349 = vld [vmem:[#allocation7 + $0x30] sm:$0xf]
          %v350 = vld [vmem:[#allocation7 + $0x34] sm:$0xf]
          %v351 = vld [vmem:[#allocation7 + $0x38] sm:$0xf]
          %v352 = vld [vmem:[#allocation7 + $0x3c] sm:$0xf]
          %353 = vst [vmem:[#allocation2] sm:$0xf] %v337
          %354 = vst [vmem:[#allocation2 + $0x4] sm:$0xf] %v338
          %355 = vst [vmem:[#allocation2 + $0x8] sm:$0xf] %v339
          %356 = vst [vmem:[#allocation2 + $0xc] sm:$0xf] %v340
          %357 = vst [vmem:[#allocation2 + $0x10] sm:$0xf] %v341
          %358 = vst [vmem:[#allocation2 + $0x14] sm:$0xf] %v342
          %359 = vst [vmem:[#allocation2 + $0x18] sm:$0xf] %v343
          %360 = vst [vmem:[#allocation2 + $0x1c] sm:$0xf] %v344
          %361 = vst [vmem:[#allocation2 + $0x20] sm:$0xf] %v345
          %362 = vst [vmem:[#allocation2 + $0x24] sm:$0xf] %v346
          %363 = vst [vmem:[#allocation2 + $0x28] sm:$0xf] %v347
          %364 = vst [vmem:[#allocation2 + $0x2c] sm:$0xf] %v348
          %365 = vst [vmem:[#allocation2 + $0x30] sm:$0xf] %v349
          %366 = vst [vmem:[#allocation2 + $0x34] sm:$0xf] %v350
          %367 = vst [vmem:[#allocation2 + $0x38] sm:$0xf] %v351
          %368 = vst [vmem:[#allocation2 + $0x3c] sm:$0xf] %v352
        $region52: #{tpu_custom_call.1} parent=35 // pred_fallthru
          _
        // Predicated region
        $region53: #{tpu_custom_call.1} parent=35 // pred_check
          %p369 = pneg %p332
        $region54: #{tpu_custom_call.1} parent=35 // pred_check_branch
          %371 = sbr.rel (%p369) target = $region56
        $region55: #{tpu_custom_call.1} parent=35 // pred_region
          %372 = vst [vmem:[#allocation3] sm:$0xff] 0.0
          %373 = vst [vmem:[#allocation3 + $0x8] sm:$0xff] 0.0
          %374 = vst [vmem:[#allocation3 + $0x10] sm:$0xff] 0.0
          %375 = vst [vmem:[#allocation3 + $0x18] sm:$0xff] 0.0
          %376 = vst [vmem:[#allocation3 + $0x20] sm:$0xff] 0.0
          %377 = vst [vmem:[#allocation3 + $0x28] sm:$0xff] 0.0
          %378 = vst [vmem:[#allocation3 + $0x30] sm:$0xff] 0.0
          %379 = vst [vmem:[#allocation3 + $0x38] sm:$0xff] 0.0
          %380 = vst [vmem:[#allocation3 + $0x40] sm:$0xff] 0.0
          %381 = vst [vmem:[#allocation3 + $0x48] sm:$0xff] 0.0
          %382 = vst [vmem:[#allocation3 + $0x50] sm:$0xff] 0.0
          %383 = vst [vmem:[#allocation3 + $0x58] sm:$0xff] 0.0
          %384 = vst [vmem:[#allocation3 + $0x60] sm:$0xff] 0.0
          %385 = vst [vmem:[#allocation3 + $0x68] sm:$0xff] 0.0
          %386 = vst [vmem:[#allocation3 + $0x70] sm:$0xff] 0.0
          %387 = vst [vmem:[#allocation3 + $0x78] sm:$0xff] 0.0
        $region56: #{tpu_custom_call.1} parent=35 // pred_fallthru
          _
        %s388 = smul.u32 %s28, 128
        %s389 = sshra.s32 %s388, 3
        %s390 = sand.u32 %s388, 7
        %s391 = smul.u32 %s314, 16
        %s392 = sadd.s32 %s389, %s391
        %s393 = smul.addr %s392, 4
        %s394 = scalar_lea.vmem [#allocation2], %s393
        %v395 = vld [vmem:[%s394] sm:$0xf]
        %v396 = vld [vmem:[%s394 + $0x4] sm:$0xf]
        %v397 = vld [vmem:[%s394 + $0x8] sm:$0xf]
        %v398 = vld [vmem:[%s394 + $0xc] sm:$0xf]
        %v399 = vld [vmem:[%s394 + $0x10] sm:$0xf]
        %v400 = vld [vmem:[%s394 + $0x14] sm:$0xf]
        %v401 = vld [vmem:[%s394 + $0x18] sm:$0xf]
        %v402 = vld [vmem:[%s394 + $0x1c] sm:$0xf]
        %v403 = vld [vmem:[%s394 + $0x20] sm:$0xf]
        %v404 = vld [vmem:[%s394 + $0x24] sm:$0xf]
        %v405 = vld [vmem:[%s394 + $0x28] sm:$0xf]
        %v406 = vld [vmem:[%s394 + $0x2c] sm:$0xf]
        %v407 = vld [vmem:[%s394 + $0x30] sm:$0xf]
        %v408 = vld [vmem:[%s394 + $0x34] sm:$0xf]
        %v409 = vld [vmem:[%s394 + $0x38] sm:$0xf]
        %v410 = vld [vmem:[%s394 + $0x3c] sm:$0xf]
        %v411 = vld [vmem:[#allocation3] sm:$0xff]
        %v412 = vld [vmem:[#allocation3 + $0x8] sm:$0xff]
        %v413 = vld [vmem:[#allocation3 + $0x10] sm:$0xff]
        %v414 = vld [vmem:[#allocation3 + $0x18] sm:$0xff]
        %v415 = vld [vmem:[#allocation3 + $0x20] sm:$0xff]
        %v416 = vld [vmem:[#allocation3 + $0x28] sm:$0xff]
        %v417 = vld [vmem:[#allocation3 + $0x30] sm:$0xff]
        %v418 = vld [vmem:[#allocation3 + $0x38] sm:$0xff]
        %v419 = vld [vmem:[#allocation3 + $0x40] sm:$0xff]
        %v420 = vld [vmem:[#allocation3 + $0x48] sm:$0xff]
        %v421 = vld [vmem:[#allocation3 + $0x50] sm:$0xff]
        %v422 = vld [vmem:[#allocation3 + $0x58] sm:$0xff]
        %v423 = vld [vmem:[#allocation3 + $0x60] sm:$0xff]
        %v424 = vld [vmem:[#allocation3 + $0x68] sm:$0xff]
        %v425 = vld [vmem:[#allocation3 + $0x70] sm:$0xff]
        %v426 = vld [vmem:[#allocation3 + $0x78] sm:$0xff]
        %v427 = vld [vmem:[#allocation4] sm:$0xff]
        %v428 = vld [vmem:[#allocation4 + $0x8] sm:$0xff]
        %v429 = vld [vmem:[#allocation4 + $0x10] sm:$0xff]
        %v430 = vld [vmem:[#allocation4 + $0x18] sm:$0xff]
        %v431 = vunpack.c.l.s8.bf16 %v427
        %v432 = vunpack.c.h.s8.bf16 %v427
        %v433 = vunpack.c.l.s8.bf16 %v428
        %v434 = vunpack.c.h.s8.bf16 %v428
        %v435 = vunpack.c.l.s8.bf16 %v429
        %v436 = vunpack.c.h.s8.bf16 %v429
        %v437 = vunpack.c.l.s8.bf16 %v430
        %v438 = vunpack.c.h.s8.bf16 %v430
        %v455 = vunpack.c.l.b16 %v395
        %v456 = vunpack.c.l.b16 %v396
        %v457 = vunpack.c.l.b16 %v397
        %v458 = vunpack.c.l.b16 %v398
        %v459 = vunpack.c.l.b16 %v399
        %v460 = vunpack.c.l.b16 %v400
        %v461 = vunpack.c.l.b16 %v401
        %v462 = vunpack.c.l.b16 %v402
        %v463 = vunpack.c.l.b16 %v403
        %v464 = vunpack.c.l.b16 %v404
        %v465 = vunpack.c.l.b16 %v405
        %v466 = vunpack.c.l.b16 %v406
        %v467 = vunpack.c.l.b16 %v407
        %v468 = vunpack.c.l.b16 %v408
        %v469 = vunpack.c.l.b16 %v409
        %v470 = vunpack.c.l.b16 %v410
        %v471 = vpack.c.b16 %v456, %v455
        %v472 = vpack.c.b16 %v458, %v457
        %v473 = vpack.c.b16 %v460, %v459
        %v474 = vpack.c.b16 %v462, %v461
        %v475 = vpack.c.b16 %v464, %v463
        %v476 = vpack.c.b16 %v466, %v465
        %v477 = vpack.c.b16 %v468, %v467
        %v478 = vpack.c.b16 %v470, %v469
        %487 = vmatprep.subr.bf16.mxu0 0
        %488 = vmatpush1.bf16.msra.mxu0 %v478
        %489 = vmatprep.subr.bf16.mxu0 0
        %490 = vmatpush1.bf16.msra.mxu0 %v477
        %491 = vmatprep.subr.bf16.mxu0 0
        %492 = vmatpush1.bf16.msra.mxu0 %v476
        %493 = vmatprep.subr.bf16.mxu0 0
        %494 = vmatpush1.bf16.msra.mxu0 %v475
        %495 = vmatprep.subr.bf16.mxu0 0
        %496 = vmatpush1.bf16.msra.mxu0 %v474
        %497 = vmatprep.subr.bf16.mxu0 0
        %498 = vmatpush1.bf16.msra.mxu0 %v473
        %499 = vmatprep.subr.bf16.mxu0 0
        %500 = vmatpush1.bf16.msra.mxu0 %v472
        %501 = vmatprep.subr.bf16.mxu0 0
        %502 = vmatpush1.bf16.msra.mxu0 %v471
        %503 = vmatprep.subr.bf16.mxu0 0
        %504 = vmatpush2.bf16.msra.mxu0 0
        %505 = vmatprep.subr.bf16.mxu0 0
        %506 = vmatpush2.bf16.msra.mxu0 0
        %507 = vmatprep.subr.bf16.mxu0 0
        %508 = vmatpush2.bf16.msra.mxu0 0
        %509 = vmatprep.subr.bf16.mxu0 0
        %510 = vmatpush2.bf16.msra.mxu0 0
        %511 = vmatprep.subr.bf16.mxu0 0
        %512 = vmatpush2.bf16.msra.mxu0 0
        %513 = vmatprep.subr.bf16.mxu0 0
        %514 = vmatpush2.bf16.msra.mxu0 0
        %515 = vmatprep.subr.bf16.mxu0 0
        %516 = vmatpush2.bf16.msra.mxu0 0
        %517 = vmatprep.subr.bf16.mxu0 0
        %518 = vmatpush2.bf16.msra.mxu0 0
        %519 = vmatprep.mubr.bf16.mxu0 0
        %520 = vmatmul.mubr.bf16.gmra.mxu0 %v431
        %v521 = vpop.f32.mrf.mxu0
        %v522 = vadd.f32 0.0, %v521
        %v523 = vpop.f32.mrf.mxu0
        %v524 = vpop.f32.mrf.mxu0
        %v525 = vadd.f32 0.0, %v524
        %v526 = vpop.f32.mrf.mxu0
        %527 = vmatprep.mubr.bf16.mxu0 0
        %528 = vmatmul.mubr.bf16.gmra.mxu0 %v432
        %v529 = vpop.f32.mrf.mxu0
        %v530 = vadd.f32 0.0, %v529
        %v531 = vpop.f32.mrf.mxu0
        %v532 = vpop.f32.mrf.mxu0
        %v533 = vadd.f32 0.0, %v532
        %v534 = vpop.f32.mrf.mxu0
        %535 = vmatprep.mubr.bf16.mxu0 0
        %536 = vmatmul.mubr.bf16.gmra.mxu0 %v433
        %v537 = vpop.f32.mrf.mxu0
        %v538 = vadd.f32 0.0, %v537
        %v539 = vpop.f32.mrf.mxu0
        %v540 = vpop.f32.mrf.mxu0
        %v541 = vadd.f32 0.0, %v540
        %v542 = vpop.f32.mrf.mxu0
        %543 = vmatprep.mubr.bf16.mxu0 0
        %544 = vmatmul.mubr.bf16.gmra.mxu0 %v434
        %v545 = vpop.f32.mrf.mxu0
        %v546 = vadd.f32 0.0, %v545
        %v547 = vpop.f32.mrf.mxu0
        %v548 = vpop.f32.mrf.mxu0
        %v549 = vadd.f32 0.0, %v548
        %v550 = vpop.f32.mrf.mxu0
        %551 = vmatprep.mubr.bf16.mxu0 0
        %552 = vmatmul.mubr.bf16.gmra.mxu0 %v435
        %v553 = vpop.f32.mrf.mxu0
        %v554 = vadd.f32 0.0, %v553
        %v555 = vpop.f32.mrf.mxu0
        %v556 = vpop.f32.mrf.mxu0
        %v557 = vadd.f32 0.0, %v556
        %v558 = vpop.f32.mrf.mxu0
        %559 = vmatprep.mubr.bf16.mxu0 0
        %560 = vmatmul.mubr.bf16.gmra.mxu0 %v436
        %v561 = vpop.f32.mrf.mxu0
        %v562 = vadd.f32 0.0, %v561
        %v563 = vpop.f32.mrf.mxu0
        %v564 = vpop.f32.mrf.mxu0
        %v565 = vadd.f32 0.0, %v564
        %v566 = vpop.f32.mrf.mxu0
        %567 = vmatprep.mubr.bf16.mxu0 0
        %568 = vmatmul.mubr.bf16.gmra.mxu0 %v437
        %v569 = vpop.f32.mrf.mxu0
        %v570 = vadd.f32 0.0, %v569
        %v571 = vpop.f32.mrf.mxu0
        %v572 = vpop.f32.mrf.mxu0
        %v573 = vadd.f32 0.0, %v572
        %v574 = vpop.f32.mrf.mxu0
        %575 = vmatprep.mubr.bf16.mxu0 0
        %576 = vmatmul.mubr.bf16.gmra.mxu0 %v438
        %v577 = vpop.f32.mrf.mxu0
        %v578 = vadd.f32 0.0, %v577
        %v579 = vpop.f32.mrf.mxu0
        %v580 = vpop.f32.mrf.mxu0
        %v581 = vadd.f32 0.0, %v580
        %v582 = vpop.f32.mrf.mxu0
        %583 = vdwg.mxu0
        %v584 = vadd.f32 %v411, %v522
        %v585 = vadd.f32 %v412, %v525
        %v586 = vadd.f32 %v413, %v530
        %v587 = vadd.f32 %v414, %v533
        %v588 = vadd.f32 %v415, %v538
        %v589 = vadd.f32 %v416, %v541
        %v590 = vadd.f32 %v417, %v546
        %v591 = vadd.f32 %v418, %v549
        %v592 = vadd.f32 %v419, %v554
        %v593 = vadd.f32 %v420, %v557
        %v594 = vadd.f32 %v421, %v562
        %v595 = vadd.f32 %v422, %v565
        %v596 = vadd.f32 %v423, %v570
        %v597 = vadd.f32 %v424, %v573
        %v598 = vadd.f32 %v425, %v578
        %v599 = vadd.f32 %v426, %v581
        %600 = vst [vmem:[#allocation3] sm:$0xff] %v584
        %601 = vst [vmem:[#allocation3 + $0x8] sm:$0xff] %v585
        %602 = vst [vmem:[#allocation3 + $0x10] sm:$0xff] %v586
        %603 = vst [vmem:[#allocation3 + $0x18] sm:$0xff] %v587
        %604 = vst [vmem:[#allocation3 + $0x20] sm:$0xff] %v588
        %605 = vst [vmem:[#allocation3 + $0x28] sm:$0xff] %v589
        %606 = vst [vmem:[#allocation3 + $0x30] sm:$0xff] %v590
        %607 = vst [vmem:[#allocation3 + $0x38] sm:$0xff] %v591
        %608 = vst [vmem:[#allocation3 + $0x40] sm:$0xff] %v592
        %609 = vst [vmem:[#allocation3 + $0x48] sm:$0xff] %v593
        %610 = vst [vmem:[#allocation3 + $0x50] sm:$0xff] %v594
        %611 = vst [vmem:[#allocation3 + $0x58] sm:$0xff] %v595
        %612 = vst [vmem:[#allocation3 + $0x60] sm:$0xff] %v596
        %613 = vst [vmem:[#allocation3 + $0x68] sm:$0xff] %v597
        %614 = vst [vmem:[#allocation3 + $0x70] sm:$0xff] %v598
        %615 = vst [vmem:[#allocation3 + $0x78] sm:$0xff] %v599
        // Predicated region
        $region57: #{tpu_custom_call.1} parent=35 // pred_check
          %p616 = pneg %p332
        $region58: #{tpu_custom_call.1} parent=35 // pred_check_branch
          %618 = sbr.rel (%p616) target = $region60
        $region59: #{tpu_custom_call.1} parent=35 // pred_region
          %s619 = smul.u32 %s27, 128
          %s620 = sshra.s32 %s619, 3
          %s621 = sand.u32 %s619, 7
          %s622 = sadd.s32 %s620, %s391
          %s623 = smul.addr %s622, 4
          %s624 = scalar_lea.vmem [#allocation2], %s623
          %v625 = vld [vmem:[%s624] sm:$0xf]
          %v626 = vld [vmem:[%s624 + $0x4] sm:$0xf]
          %v627 = vld [vmem:[%s624 + $0x8] sm:$0xf]
          %v628 = vld [vmem:[%s624 + $0xc] sm:$0xf]
          %v629 = vld [vmem:[%s624 + $0x10] sm:$0xf]
          %v630 = vld [vmem:[%s624 + $0x14] sm:$0xf]
          %v631 = vld [vmem:[%s624 + $0x18] sm:$0xf]
          %v632 = vld [vmem:[%s624 + $0x1c] sm:$0xf]
          %v633 = vld [vmem:[%s624 + $0x20] sm:$0xf]
          %v634 = vld [vmem:[%s624 + $0x24] sm:$0xf]
          %v635 = vld [vmem:[%s624 + $0x28] sm:$0xf]
          %v636 = vld [vmem:[%s624 + $0x2c] sm:$0xf]
          %v637 = vld [vmem:[%s624 + $0x30] sm:$0xf]
          %v638 = vld [vmem:[%s624 + $0x34] sm:$0xf]
          %v639 = vld [vmem:[%s624 + $0x38] sm:$0xf]
          %v640 = vld [vmem:[%s624 + $0x3c] sm:$0xf]
          %v641 = vld [vmem:[#allocation3] sm:$0xff]
          %v642 = vld [vmem:[#allocation3 + $0x8] sm:$0xff]
          %v643 = vld [vmem:[#allocation3 + $0x10] sm:$0xff]
          %v644 = vld [vmem:[#allocation3 + $0x18] sm:$0xff]
          %v645 = vld [vmem:[#allocation3 + $0x20] sm:$0xff]
          %v646 = vld [vmem:[#allocation3 + $0x28] sm:$0xff]
          %v647 = vld [vmem:[#allocation3 + $0x30] sm:$0xff]
          %v648 = vld [vmem:[#allocation3 + $0x38] sm:$0xff]
          %v649 = vld [vmem:[#allocation3 + $0x40] sm:$0xff]
          %v650 = vld [vmem:[#allocation3 + $0x48] sm:$0xff]
          %v651 = vld [vmem:[#allocation3 + $0x50] sm:$0xff]
          %v652 = vld [vmem:[#allocation3 + $0x58] sm:$0xff]
          %v653 = vld [vmem:[#allocation3 + $0x60] sm:$0xff]
          %v654 = vld [vmem:[#allocation3 + $0x68] sm:$0xff]
          %v655 = vld [vmem:[#allocation3 + $0x70] sm:$0xff]
          %v656 = vld [vmem:[#allocation3 + $0x78] sm:$0xff]
          %v657 = vpack.c.bf16 %v642, %v641
          %v658 = vpack.c.bf16 %v644, %v643
          %v659 = vpack.c.bf16 %v646, %v645
          %v660 = vpack.c.bf16 %v648, %v647
          %v661 = vpack.c.bf16 %v650, %v649
          %v662 = vpack.c.bf16 %v652, %v651
          %v663 = vpack.c.bf16 %v654, %v653
          %v664 = vpack.c.bf16 %v656, %v655
          %v665 = vld [vmem:[%s273] sm:$0xf]
          %v666 = vld [vmem:[%s273 + $0x4] sm:$0xf]
          %v667 = vld [vmem:[%s273 + $0x8] sm:$0xf]
          %v668 = vld [vmem:[%s273 + $0xc] sm:$0xf]
          %v669 = vld [vmem:[%s273 + $0x10] sm:$0xf]
          %v670 = vld [vmem:[%s273 + $0x14] sm:$0xf]
          %v671 = vld [vmem:[%s273 + $0x18] sm:$0xf]
          %v672 = vld [vmem:[%s273 + $0x1c] sm:$0xf]
          %v673 = vld [vmem:[%s273 + $0x20] sm:$0xf]
          %v674 = vld [vmem:[%s273 + $0x24] sm:$0xf]
          %v675 = vld [vmem:[%s273 + $0x28] sm:$0xf]
          %v676 = vld [vmem:[%s273 + $0x2c] sm:$0xf]
          %v677 = vld [vmem:[%s273 + $0x30] sm:$0xf]
          %v678 = vld [vmem:[%s273 + $0x34] sm:$0xf]
          %v679 = vld [vmem:[%s273 + $0x38] sm:$0xf]
          %v680 = vld [vmem:[%s273 + $0x3c] sm:$0xf]
          %s681 = scalar_lea.vmem %s273, 64 [#allocation9]
          %v682 = vld [vmem:[%s681] sm:$0xf]
          %v683 = vld [vmem:[%s681 + $0x4] sm:$0xf]
          %v684 = vld [vmem:[%s681 + $0x8] sm:$0xf]
          %v685 = vld [vmem:[%s681 + $0xc] sm:$0xf]
          %v686 = vld [vmem:[%s681 + $0x10] sm:$0xf]
          %v687 = vld [vmem:[%s681 + $0x14] sm:$0xf]
          %v688 = vld [vmem:[%s681 + $0x18] sm:$0xf]
          %v689 = vld [vmem:[%s681 + $0x1c] sm:$0xf]
          %v690 = vld [vmem:[%s681 + $0x20] sm:$0xf]
          %v691 = vld [vmem:[%s681 + $0x24] sm:$0xf]
          %v692 = vld [vmem:[%s681 + $0x28] sm:$0xf]
          %v693 = vld [vmem:[%s681 + $0x2c] sm:$0xf]
          %v694 = vld [vmem:[%s681 + $0x30] sm:$0xf]
          %v695 = vld [vmem:[%s681 + $0x34] sm:$0xf]
          %v696 = vld [vmem:[%s681 + $0x38] sm:$0xf]
          %v697 = vld [vmem:[%s681 + $0x3c] sm:$0xf]
          %v714 = vunpack.c.l.b16 %v625
          %v715 = vunpack.c.l.b16 %v626
          %v716 = vunpack.c.l.b16 %v627
          %v717 = vunpack.c.l.b16 %v628
          %v718 = vunpack.c.l.b16 %v629
          %v719 = vunpack.c.l.b16 %v630
          %v720 = vunpack.c.l.b16 %v631
          %v721 = vunpack.c.l.b16 %v632
          %v722 = vunpack.c.l.b16 %v633
          %v723 = vunpack.c.l.b16 %v634
          %v724 = vunpack.c.l.b16 %v635
          %v725 = vunpack.c.l.b16 %v636
          %v726 = vunpack.c.l.b16 %v637
          %v727 = vunpack.c.l.b16 %v638
          %v728 = vunpack.c.l.b16 %v639
          %v729 = vunpack.c.l.b16 %v640
          %v730 = vpack.c.b16 %v715, %v714
          %v731 = vpack.c.b16 %v717, %v716
          %v732 = vpack.c.b16 %v719, %v718
          %v733 = vpack.c.b16 %v721, %v720
          %v734 = vpack.c.b16 %v723, %v722
          %v735 = vpack.c.b16 %v725, %v724
          %v736 = vpack.c.b16 %v727, %v726
          %v737 = vpack.c.b16 %v729, %v728
          %v762 = vunpack.c.l.b16 %v682
          %v763 = vunpack.c.l.b16 %v683
          %v764 = vunpack.c.l.b16 %v684
          %v765 = vunpack.c.l.b16 %v685
          %v766 = vunpack.c.l.b16 %v686
          %v767 = vunpack.c.l.b16 %v687
          %v768 = vunpack.c.l.b16 %v688
          %v769 = vunpack.c.l.b16 %v689
          %v770 = vunpack.c.l.b16 %v690
          %v771 = vunpack.c.l.b16 %v691
          %v772 = vunpack.c.l.b16 %v692
          %v773 = vunpack.c.l.b16 %v693
          %v774 = vunpack.c.l.b16 %v694
          %v775 = vunpack.c.l.b16 %v695
          %v776 = vunpack.c.l.b16 %v696
          %v777 = vunpack.c.l.b16 %v697
          %v778 = vpack.c.b16 %v763, %v762
          %v779 = vpack.c.b16 %v765, %v764
          %v780 = vpack.c.b16 %v767, %v766
          %v781 = vpack.c.b16 %v769, %v768
          %v782 = vpack.c.b16 %v771, %v770
          %v783 = vpack.c.b16 %v773, %v772
          %v784 = vpack.c.b16 %v775, %v774
          %v785 = vpack.c.b16 %v777, %v776
          %794 = vmatprep.subr.bf16.mxu0 0
          %795 = vmatpush1.bf16.msra.mxu0 %v785
          %796 = vmatprep.subr.bf16.mxu0 0
          %797 = vmatpush1.bf16.msra.mxu0 %v784
          %798 = vmatprep.subr.bf16.mxu0 0
          %799 = vmatpush1.bf16.msra.mxu0 %v783
          %800 = vmatprep.subr.bf16.mxu0 0
          %801 = vmatpush1.bf16.msra.mxu0 %v782
          %802 = vmatprep.subr.bf16.mxu0 0
          %803 = vmatpush1.bf16.msra.mxu0 %v781
          %804 = vmatprep.subr.bf16.mxu0 0
          %805 = vmatpush1.bf16.msra.mxu0 %v780
          %806 = vmatprep.subr.bf16.mxu0 0
          %807 = vmatpush1.bf16.msra.mxu0 %v779
          %808 = vmatprep.subr.bf16.mxu0 0
          %809 = vmatpush1.bf16.msra.mxu0 %v778
          %810 = vmatprep.subr.bf16.mxu0 0
          %811 = vmatpush2.bf16.msra.mxu0 0
          %812 = vmatprep.subr.bf16.mxu0 0
          %813 = vmatpush2.bf16.msra.mxu0 0
          %814 = vmatprep.subr.bf16.mxu0 0
          %815 = vmatpush2.bf16.msra.mxu0 0
          %816 = vmatprep.subr.bf16.mxu0 0
          %817 = vmatpush2.bf16.msra.mxu0 0
          %818 = vmatprep.subr.bf16.mxu0 0
          %819 = vmatpush2.bf16.msra.mxu0 0
          %820 = vmatprep.subr.bf16.mxu0 0
          %821 = vmatpush2.bf16.msra.mxu0 0
          %822 = vmatprep.subr.bf16.mxu0 0
          %823 = vmatpush2.bf16.msra.mxu0 0
          %824 = vmatprep.subr.bf16.mxu0 0
          %825 = vmatpush2.bf16.msra.mxu0 0
          %826 = vmatprep.mubr.bf16.mxu0 0
          %827 = vmatmul.mubr.bf16.gmra.mxu0 %v730
          %v828 = vpop.f32.mrf.mxu0
          %v829 = vadd.f32 0.0, %v828
          %v830 = vpop.f32.mrf.mxu0
          %v831 = vpop.f32.mrf.mxu0
          %v832 = vadd.f32 0.0, %v831
          %v833 = vpop.f32.mrf.mxu0
          %834 = vmatprep.mubr.bf16.mxu0 0
          %835 = vmatmul.mubr.bf16.gmra.mxu0 %v731
          %v836 = vpop.f32.mrf.mxu0
          %v837 = vadd.f32 0.0, %v836
          %v838 = vpop.f32.mrf.mxu0
          %v839 = vpop.f32.mrf.mxu0
          %v840 = vadd.f32 0.0, %v839
          %v841 = vpop.f32.mrf.mxu0
          %842 = vmatprep.mubr.bf16.mxu0 0
          %843 = vmatmul.mubr.bf16.gmra.mxu0 %v732
          %v844 = vpop.f32.mrf.mxu0
          %v845 = vadd.f32 0.0, %v844
          %v846 = vpop.f32.mrf.mxu0
          %v847 = vpop.f32.mrf.mxu0
          %v848 = vadd.f32 0.0, %v847
          %v849 = vpop.f32.mrf.mxu0
          %850 = vmatprep.mubr.bf16.mxu0 0
          %851 = vmatmul.mubr.bf16.gmra.mxu0 %v733
          %v852 = vpop.f32.mrf.mxu0
          %v853 = vadd.f32 0.0, %v852
          %v854 = vpop.f32.mrf.mxu0
          %v855 = vpop.f32.mrf.mxu0
          %v856 = vadd.f32 0.0, %v855
          %v857 = vpop.f32.mrf.mxu0
          %858 = vmatprep.mubr.bf16.mxu0 0
          %859 = vmatmul.mubr.bf16.gmra.mxu0 %v734
          %v860 = vpop.f32.mrf.mxu0
          %v861 = vadd.f32 0.0, %v860
          %v862 = vpop.f32.mrf.mxu0
          %v863 = vpop.f32.mrf.mxu0
          %v864 = vadd.f32 0.0, %v863
          %v865 = vpop.f32.mrf.mxu0
          %866 = vmatprep.mubr.bf16.mxu0 0
          %867 = vmatmul.mubr.bf16.gmra.mxu0 %v735
          %v868 = vpop.f32.mrf.mxu0
          %v869 = vadd.f32 0.0, %v868
          %v870 = vpop.f32.mrf.mxu0
          %v871 = vpop.f32.mrf.mxu0
          %v872 = vadd.f32 0.0, %v871
          %v873 = vpop.f32.mrf.mxu0
          %874 = vmatprep.mubr.bf16.mxu0 0
          %875 = vmatmul.mubr.bf16.gmra.mxu0 %v736
          %v876 = vpop.f32.mrf.mxu0
          %v877 = vadd.f32 0.0, %v876
          %v878 = vpop.f32.mrf.mxu0
          %v879 = vpop.f32.mrf.mxu0
          %v880 = vadd.f32 0.0, %v879
          %v881 = vpop.f32.mrf.mxu0
          %882 = vmatprep.mubr.bf16.mxu0 0
          %883 = vmatmul.mubr.bf16.gmra.mxu0 %v737
          %v884 = vpop.f32.mrf.mxu0
          %v885 = vadd.f32 0.0, %v884
          %v886 = vpop.f32.mrf.mxu0
          %v887 = vpop.f32.mrf.mxu0
          %v888 = vadd.f32 0.0, %v887
          %v889 = vpop.f32.mrf.mxu0
          %890 = vdwg.mxu0
          %v907 = vunpack.c.l.b16 %v665
          %v908 = vunpack.c.l.b16 %v666
          %v909 = vunpack.c.l.b16 %v667
          %v910 = vunpack.c.l.b16 %v668
          %v911 = vunpack.c.l.b16 %v669
          %v912 = vunpack.c.l.b16 %v670
          %v913 = vunpack.c.l.b16 %v671
          %v914 = vunpack.c.l.b16 %v672
          %v915 = vunpack.c.l.b16 %v673
          %v916 = vunpack.c.l.b16 %v674
          %v917 = vunpack.c.l.b16 %v675
          %v918 = vunpack.c.l.b16 %v676
          %v919 = vunpack.c.l.b16 %v677
          %v920 = vunpack.c.l.b16 %v678
          %v921 = vunpack.c.l.b16 %v679
          %v922 = vunpack.c.l.b16 %v680
          %v923 = vpack.c.b16 %v908, %v907
          %v924 = vpack.c.b16 %v910, %v909
          %v925 = vpack.c.b16 %v912, %v911
          %v926 = vpack.c.b16 %v914, %v913
          %v927 = vpack.c.b16 %v916, %v915
          %v928 = vpack.c.b16 %v918, %v917
          %v929 = vpack.c.b16 %v920, %v919
          %v930 = vpack.c.b16 %v922, %v921
          %939 = vmatprep.subr.bf16.mxu0 0
          %940 = vmatpush1.bf16.msra.mxu0 %v930
          %941 = vmatprep.subr.bf16.mxu0 0
          %942 = vmatpush1.bf16.msra.mxu0 %v929
          %943 = vmatprep.subr.bf16.mxu0 0
          %944 = vmatpush1.bf16.msra.mxu0 %v928
          %945 = vmatprep.subr.bf16.mxu0 0
          %946 = vmatpush1.bf16.msra.mxu0 %v927
          %947 = vmatprep.subr.bf16.mxu0 0
          %948 = vmatpush1.bf16.msra.mxu0 %v926
          %949 = vmatprep.subr.bf16.mxu0 0
          %950 = vmatpush1.bf16.msra.mxu0 %v925
          %951 = vmatprep.subr.bf16.mxu0 0
          %952 = vmatpush1.bf16.msra.mxu0 %v924
          %953 = vmatprep.subr.bf16.mxu0 0
          %954 = vmatpush1.bf16.msra.mxu0 %v923
          %955 = vmatprep.subr.bf16.mxu0 0
          %956 = vmatpush2.bf16.msra.mxu0 0
          %957 = vmatprep.subr.bf16.mxu0 0
          %958 = vmatpush2.bf16.msra.mxu0 0
          %959 = vmatprep.subr.bf16.mxu0 0
          %960 = vmatpush2.bf16.msra.mxu0 0
          %961 = vmatprep.subr.bf16.mxu0 0
          %962 = vmatpush2.bf16.msra.mxu0 0
          %963 = vmatprep.subr.bf16.mxu0 0
          %964 = vmatpush2.bf16.msra.mxu0 0
          %965 = vmatprep.subr.bf16.mxu0 0
          %966 = vmatpush2.bf16.msra.mxu0 0
          %967 = vmatprep.subr.bf16.mxu0 0
          %968 = vmatpush2.bf16.msra.mxu0 0
          %969 = vmatprep.subr.bf16.mxu0 0
          %970 = vmatpush2.bf16.msra.mxu0 0
          %971 = vmatprep.mubr.bf16.mxu0 0
          %972 = vmatmul.mubr.bf16.gmra.mxu0 %v657
          %v973 = vpop.f32.mrf.mxu0
          %v974 = vadd.f32 %v829, %v973
          %v975 = vpop.f32.mrf.mxu0
          %v976 = vpop.f32.mrf.mxu0
          %v977 = vadd.f32 %v832, %v976
          %v978 = vpop.f32.mrf.mxu0
          %979 = vmatprep.mubr.bf16.mxu0 0
          %980 = vmatmul.mubr.bf16.gmra.mxu0 %v658
          %v981 = vpop.f32.mrf.mxu0
          %v982 = vadd.f32 %v837, %v981
          %v983 = vpop.f32.mrf.mxu0
          %v984 = vpop.f32.mrf.mxu0
          %v985 = vadd.f32 %v840, %v984
          %v986 = vpop.f32.mrf.mxu0
          %987 = vmatprep.mubr.bf16.mxu0 0
          %988 = vmatmul.mubr.bf16.gmra.mxu0 %v659
          %v989 = vpop.f32.mrf.mxu0
          %v990 = vadd.f32 %v845, %v989
          %v991 = vpop.f32.mrf.mxu0
          %v992 = vpop.f32.mrf.mxu0
          %v993 = vadd.f32 %v848, %v992
          %v994 = vpop.f32.mrf.mxu0
          %995 = vmatprep.mubr.bf16.mxu0 0
          %996 = vmatmul.mubr.bf16.gmra.mxu0 %v660
          %v997 = vpop.f32.mrf.mxu0
          %v998 = vadd.f32 %v853, %v997
          %v999 = vpop.f32.mrf.mxu0
          %v1000 = vpop.f32.mrf.mxu0
          %v1001 = vadd.f32 %v856, %v1000
          %v1002 = vpop.f32.mrf.mxu0
          %1003 = vmatprep.mubr.bf16.mxu0 0
          %1004 = vmatmul.mubr.bf16.gmra.mxu0 %v661
          %v1005 = vpop.f32.mrf.mxu0
          %v1006 = vadd.f32 %v861, %v1005
          %v1007 = vpop.f32.mrf.mxu0
          %v1008 = vpop.f32.mrf.mxu0
          %v1009 = vadd.f32 %v864, %v1008
          %v1010 = vpop.f32.mrf.mxu0
          %1011 = vmatprep.mubr.bf16.mxu0 0
          %1012 = vmatmul.mubr.bf16.gmra.mxu0 %v662
          %v1013 = vpop.f32.mrf.mxu0
          %v1014 = vadd.f32 %v869, %v1013
          %v1015 = vpop.f32.mrf.mxu0
          %v1016 = vpop.f32.mrf.mxu0
          %v1017 = vadd.f32 %v872, %v1016
          %v1018 = vpop.f32.mrf.mxu0
          %1019 = vmatprep.mubr.bf16.mxu0 0
          %1020 = vmatmul.mubr.bf16.gmra.mxu0 %v663
          %v1021 = vpop.f32.mrf.mxu0
          %v1022 = vadd.f32 %v877, %v1021
          %v1023 = vpop.f32.mrf.mxu0
          %v1024 = vpop.f32.mrf.mxu0
          %v1025 = vadd.f32 %v880, %v1024
          %v1026 = vpop.f32.mrf.mxu0
          %1027 = vmatprep.mubr.bf16.mxu0 0
          %1028 = vmatmul.mubr.bf16.gmra.mxu0 %v664
          %v1029 = vpop.f32.mrf.mxu0
          %v1030 = vadd.f32 %v885, %v1029
          %v1031 = vpop.f32.mrf.mxu0
          %v1032 = vpop.f32.mrf.mxu0
          %v1033 = vadd.f32 %v888, %v1032
          %v1034 = vpop.f32.mrf.mxu0
          %1035 = vdwg.mxu0
          %v1036 = vld [vmem:[%s301] sm:$0x1]
          %v1038 = vlaneseq
          %v1039 = vshrl.u32 %v1038, 7
          %v1040 = vsub.s32 0, %v1039
          %v1041 = vrot.slane %v1036, %v1040
          %v1043 = vadd.f32 %v974, %v1041
          %v1044 = vadd.f32 %v977, %v1041
          %v1045 = vadd.f32 %v982, %v1041
          %v1046 = vadd.f32 %v985, %v1041
          %v1047 = vadd.f32 %v990, %v1041
          %v1048 = vadd.f32 %v993, %v1041
          %v1049 = vadd.f32 %v998, %v1041
          %v1050 = vadd.f32 %v1001, %v1041
          %v1051 = vadd.f32 %v1006, %v1041
          %v1052 = vadd.f32 %v1009, %v1041
          %v1053 = vadd.f32 %v1014, %v1041
          %v1054 = vadd.f32 %v1017, %v1041
          %v1055 = vadd.f32 %v1022, %v1041
          %v1056 = vadd.f32 %v1025, %v1041
          %v1057 = vadd.f32 %v1030, %v1041
          %v1058 = vadd.f32 %v1033, %v1041
          %vm1059 = vcmp.ge.f32.partialorder %v1043, 0.0
          %vm1060 = vcmp.ge.f32.partialorder %v1044, 0.0
          %vm1061 = vcmp.ge.f32.partialorder %v1045, 0.0
          %vm1062 = vcmp.ge.f32.partialorder %v1046, 0.0
          %vm1063 = vcmp.ge.f32.partialorder %v1047, 0.0
          %vm1064 = vcmp.ge.f32.partialorder %v1048, 0.0
          %vm1065 = vcmp.ge.f32.partialorder %v1049, 0.0
          %vm1066 = vcmp.ge.f32.partialorder %v1050, 0.0
          %vm1067 = vcmp.ge.f32.partialorder %v1051, 0.0
          %vm1068 = vcmp.ge.f32.partialorder %v1052, 0.0
          %vm1069 = vcmp.ge.f32.partialorder %v1053, 0.0
          %vm1070 = vcmp.ge.f32.partialorder %v1054, 0.0
          %vm1071 = vcmp.ge.f32.partialorder %v1055, 0.0
          %vm1072 = vcmp.ge.f32.partialorder %v1056, 0.0
          %vm1073 = vcmp.ge.f32.partialorder %v1057, 0.0
          %vm1074 = vcmp.ge.f32.partialorder %v1058, 0.0
          %v1075 = vmul.f32 %v1043, 0.01
          %v1076 = vmul.f32 %v1044, 0.01
          %v1077 = vmul.f32 %v1045, 0.01
          %v1078 = vmul.f32 %v1046, 0.01
          %v1079 = vmul.f32 %v1047, 0.01
          %v1080 = vmul.f32 %v1048, 0.01
          %v1081 = vmul.f32 %v1049, 0.01
          %v1082 = vmul.f32 %v1050, 0.01
          %v1083 = vmul.f32 %v1051, 0.01
          %v1084 = vmul.f32 %v1052, 0.01
          %v1085 = vmul.f32 %v1053, 0.01
          %v1086 = vmul.f32 %v1054, 0.01
          %v1087 = vmul.f32 %v1055, 0.01
          %v1088 = vmul.f32 %v1056, 0.01
          %v1089 = vmul.f32 %v1057, 0.01
          %v1090 = vmul.f32 %v1058, 0.01
          %v1091 = vsel %vm1059, %v1043, %v1075
          %v1092 = vsel %vm1060, %v1044, %v1076
          %v1093 = vsel %vm1061, %v1045, %v1077
          %v1094 = vsel %vm1062, %v1046, %v1078
          %v1095 = vsel %vm1063, %v1047, %v1079
          %v1096 = vsel %vm1064, %v1048, %v1080
          %v1097 = vsel %vm1065, %v1049, %v1081
          %v1098 = vsel %vm1066, %v1050, %v1082
          %v1099 = vsel %vm1067, %v1051, %v1083
          %v1100 = vsel %vm1068, %v1052, %v1084
          %v1101 = vsel %vm1069, %v1053, %v1085
          %v1102 = vsel %vm1070, %v1054, %v1086
          %v1103 = vsel %vm1071, %v1055, %v1087
          %v1104 = vsel %vm1072, %v1056, %v1088
          %v1105 = vsel %vm1073, %v1057, %v1089
          %v1106 = vsel %vm1074, %v1058, %v1090
          %v1107 = vpack.c.bf16 %v1092, %v1091
          %v1108 = vpack.c.bf16 %v1094, %v1093
          %v1109 = vpack.c.bf16 %v1096, %v1095
          %v1110 = vpack.c.bf16 %v1098, %v1097
          %v1111 = vpack.c.bf16 %v1100, %v1099
          %v1112 = vpack.c.bf16 %v1102, %v1101
          %v1113 = vpack.c.bf16 %v1104, %v1103
          %v1114 = vpack.c.bf16 %v1106, %v1105
          %v1123 = vunpack.c.l.b16 %v1107
          %v1124 = vunpack.c.h.b16 %v1107
          %v1125 = vunpack.c.l.b16 %v1108
          %v1126 = vunpack.c.h.b16 %v1108
          %v1127 = vunpack.c.l.b16 %v1109
          %v1128 = vunpack.c.h.b16 %v1109
          %v1129 = vunpack.c.l.b16 %v1110
          %v1130 = vunpack.c.h.b16 %v1110
          %v1131 = vunpack.c.l.b16 %v1111
          %v1132 = vunpack.c.h.b16 %v1111
          %v1133 = vunpack.c.l.b16 %v1112
          %v1134 = vunpack.c.h.b16 %v1112
          %v1135 = vunpack.c.l.b16 %v1113
          %v1136 = vunpack.c.h.b16 %v1113
          %v1137 = vunpack.c.l.b16 %v1114
          %v1138 = vunpack.c.h.b16 %v1114
          %v1139 = vpack.c.b16 %v1123, %v1123
          %v1140 = vpack.c.b16 %v1124, %v1124
          %v1141 = vpack.c.b16 %v1125, %v1125
          %v1142 = vpack.c.b16 %v1126, %v1126
          %v1143 = vpack.c.b16 %v1127, %v1127
          %v1144 = vpack.c.b16 %v1128, %v1128
          %v1145 = vpack.c.b16 %v1129, %v1129
          %v1146 = vpack.c.b16 %v1130, %v1130
          %v1147 = vpack.c.b16 %v1131, %v1131
          %v1148 = vpack.c.b16 %v1132, %v1132
          %v1149 = vpack.c.b16 %v1133, %v1133
          %v1150 = vpack.c.b16 %v1134, %v1134
          %v1151 = vpack.c.b16 %v1135, %v1135
          %v1152 = vpack.c.b16 %v1136, %v1136
          %v1153 = vpack.c.b16 %v1137, %v1137
          %v1154 = vpack.c.b16 %v1138, %v1138
          %s1171 = smul.u32 %s327, 16
          %s1172 = sadd.s32 %s620, %s1171
          %s1173 = smul.addr %s1172, 4
          %s1174 = scalar_lea.vmem [#allocation2], %s1173
          %1175 = vst [vmem:[%s1174] sm:$0xf] %v1139
          %1176 = vst [vmem:[%s1174 + $0x4] sm:$0xf] %v1140
          %1177 = vst [vmem:[%s1174 + $0x8] sm:$0xf] %v1141
          %1178 = vst [vmem:[%s1174 + $0xc] sm:$0xf] %v1142
          %1179 = vst [vmem:[%s1174 + $0x10] sm:$0xf] %v1143
          %1180 = vst [vmem:[%s1174 + $0x14] sm:$0xf] %v1144
          %1181 = vst [vmem:[%s1174 + $0x18] sm:$0xf] %v1145
          %1182 = vst [vmem:[%s1174 + $0x1c] sm:$0xf] %v1146
          %1183 = vst [vmem:[%s1174 + $0x20] sm:$0xf] %v1147
          %1184 = vst [vmem:[%s1174 + $0x24] sm:$0xf] %v1148
          %1185 = vst [vmem:[%s1174 + $0x28] sm:$0xf] %v1149
          %1186 = vst [vmem:[%s1174 + $0x2c] sm:$0xf] %v1150
          %1187 = vst [vmem:[%s1174 + $0x30] sm:$0xf] %v1151
          %1188 = vst [vmem:[%s1174 + $0x34] sm:$0xf] %v1152
          %1189 = vst [vmem:[%s1174 + $0x38] sm:$0xf] %v1153
          %1190 = vst [vmem:[%s1174 + $0x3c] sm:$0xf] %v1154
          %p1191 = scmp.eq.s32.totalorder %s26, 1
          // Predicated region
          $region61: #{tpu_custom_call.1} parent=59 // pred_check
            %p1192 = pneg %p1191
          $region62: #{tpu_custom_call.1} parent=59 // pred_check_branch
            %1194 = sbr.rel (%p1192) target = $region64
          $region63: #{tpu_custom_call.1} parent=59 // pred_region
            %s1195 = scalar_lea.vmem [#allocation11], %s619
            %1196 = vst [vmem:[%s1195] sm:$0xff] %v1091
            %1197 = vst [vmem:[%s1195 + $0x8] sm:$0xff] %v1092
            %1198 = vst [vmem:[%s1195 + $0x10] sm:$0xff] %v1093
            %1199 = vst [vmem:[%s1195 + $0x18] sm:$0xff] %v1094
            %1200 = vst [vmem:[%s1195 + $0x20] sm:$0xff] %v1095
            %1201 = vst [vmem:[%s1195 + $0x28] sm:$0xff] %v1096
            %1202 = vst [vmem:[%s1195 + $0x30] sm:$0xff] %v1097
            %1203 = vst [vmem:[%s1195 + $0x38] sm:$0xff] %v1098
            %1204 = vst [vmem:[%s1195 + $0x40] sm:$0xff] %v1099
            %1205 = vst [vmem:[%s1195 + $0x48] sm:$0xff] %v1100
            %1206 = vst [vmem:[%s1195 + $0x50] sm:$0xff] %v1101
            %1207 = vst [vmem:[%s1195 + $0x58] sm:$0xff] %v1102
            %1208 = vst [vmem:[%s1195 + $0x60] sm:$0xff] %v1103
            %1209 = vst [vmem:[%s1195 + $0x68] sm:$0xff] %v1104
            %1210 = vst [vmem:[%s1195 + $0x70] sm:$0xff] %v1105
            %1211 = vst [vmem:[%s1195 + $0x78] sm:$0xff] %v1106
          $region64: #{tpu_custom_call.1} parent=59 // pred_fallthru
            _
          %p1212 = scmp.eq.s32.totalorder %s26, 3
          // Predicated region
          $region65: #{tpu_custom_call.1} parent=59 // pred_check
            %p1213 = pneg %p1212
          $region66: #{tpu_custom_call.1} parent=59 // pred_check_branch
            %1215 = sbr.rel (%p1213) target = $region68
          $region67: #{tpu_custom_call.1} parent=59 // pred_region
            %s1216 = scalar_lea.vmem [#allocation10], %s619
            %1217 = vst [vmem:[%s1216] sm:$0xff] %v1091
            %1218 = vst [vmem:[%s1216 + $0x8] sm:$0xff] %v1092
            %1219 = vst [vmem:[%s1216 + $0x10] sm:$0xff] %v1093
            %1220 = vst [vmem:[%s1216 + $0x18] sm:$0xff] %v1094
            %1221 = vst [vmem:[%s1216 + $0x20] sm:$0xff] %v1095
            %1222 = vst [vmem:[%s1216 + $0x28] sm:$0xff] %v1096
            %1223 = vst [vmem:[%s1216 + $0x30] sm:$0xff] %v1097
            %1224 = vst [vmem:[%s1216 + $0x38] sm:$0xff] %v1098
            %1225 = vst [vmem:[%s1216 + $0x40] sm:$0xff] %v1099
            %1226 = vst [vmem:[%s1216 + $0x48] sm:$0xff] %v1100
            %1227 = vst [vmem:[%s1216 + $0x50] sm:$0xff] %v1101
            %1228 = vst [vmem:[%s1216 + $0x58] sm:$0xff] %v1102
            %1229 = vst [vmem:[%s1216 + $0x60] sm:$0xff] %v1103
            %1230 = vst [vmem:[%s1216 + $0x68] sm:$0xff] %v1104
            %1231 = vst [vmem:[%s1216 + $0x70] sm:$0xff] %v1105
            %1232 = vst [vmem:[%s1216 + $0x78] sm:$0xff] %v1106
          $region68: #{tpu_custom_call.1} parent=59 // pred_fallthru
            _
        $region60: #{tpu_custom_call.1} parent=35 // pred_fallthru
          _
        // Predicated region
        $region69: #{tpu_custom_call.1} parent=35 // pred_check
          %p1233 = pneg %p154
        $region70: #{tpu_custom_call.1} parent=35 // pred_check_branch
          %1235 = sbr.rel (%p1233) target = $region72
        $region71: #{tpu_custom_call.1} parent=35 // pred_region
          %s1237 = ssub.s32 2048, 2048
          %1238 = vsyncadd [#allocation6], %s1237
          %s1239 = sshll.u32 [#allocation10], 4
          %s1240 = int_to_ptr.vmem [resolvable:$true] %s1239
          %1245 = dma.vmem_to_hbm [thread:$0]  %s1240, 2048, %s4, [#allocation6], 128, 128, 8
        $region72: #{tpu_custom_call.1} parent=35 // pred_fallthru
          _
        // Predicated region
        $region73: #{tpu_custom_call.1} parent=35 // pred_check
          %p1246 = pneg %p175
        $region74: #{tpu_custom_call.1} parent=35 // pred_check_branch
          %1248 = sbr.rel (%p1246) target = $region76
        $region75: #{tpu_custom_call.1} parent=35 // pred_region
          %s1250 = ssub.s32 2048, 2048
          %1251 = vsyncadd [#allocation12], %s1250
          %s1252 = sshll.u32 [#allocation11], 4
          %s1253 = int_to_ptr.vmem [resolvable:$true] %s1252
          %1258 = dma.vmem_to_hbm [thread:$0]  %s1253, 2048, %s5, [#allocation12], 128, 128, 8
        $region76: #{tpu_custom_call.1} parent=35 // pred_fallthru
          _
        // Predicated region
        $region77: #{tpu_custom_call.1} parent=35 // pred_check
          %p1259 = pneg %p154
        $region78: #{tpu_custom_call.1} parent=35 // pred_check_branch
          %1261 = sbr.rel (%p1259) target = $region80
        $region79: #{tpu_custom_call.1} parent=35 // pred_region
          %1262 = dma.done [#allocation6], 2048
        $region80: #{tpu_custom_call.1} parent=35 // pred_fallthru
          _
        // Predicated region
        $region81: #{tpu_custom_call.1} parent=35 // pred_check
          %p1263 = pneg %p175
        $region82: #{tpu_custom_call.1} parent=35 // pred_check_branch
          %1265 = sbr.rel (%p1263) target = $region84
        $region83: #{tpu_custom_call.1} parent=35 // pred_region
          %1266 = dma.done [#allocation12], 2048
        $region84: #{tpu_custom_call.1} parent=35 // pred_fallthru
          _
      $region36: #{tpu_custom_call.1} parent=5 // pred_fallthru
        _
      %p1267 = scmp.le.s32.totalorder 2, %s16
      // Predicated region
      $region85: #{tpu_custom_call.1} parent=5 // pred_check
        %p1268 = pneg %p1267
      $region86: #{tpu_custom_call.1} parent=5 // pred_check_branch
        %1270 = sbr.rel (%p1268) target = $region88
      $region87: #{tpu_custom_call.1} parent=5 // pred_region
        %s1271 = ssub.s32 %s16, 2
      $region88: #{tpu_custom_call.1} parent=5 // pred_fallthru
        _
    $region6: #{tpu_custom_call.1} parent=1 // loop_footer
      %s20 = sadd.s32 1, %s16
    $region7: #{tpu_custom_call.1} parent=1 // loop_footer_branch
      %15 = sbr.rel target = $region3
    $region8: #{tpu_custom_call.1} parent=1 // loop_exit
      _
    %1272 = vsyncpa [#allocation5], 1
    %s1273 = scalar_lea.sflag [#allocation5], 1
    %1274 = vsyncpa %s1273, 1
    %1275 = vsyncpa [#allocation8], 1
    %1276 = vsyncpa [#allocation6], 1
    %s1277 = scalar_lea.sflag [#allocation6], 1
    %1278 = vsyncpa %s1277, 1
    %1279 = vsyncpa [#allocation12], 1

</llo_original>
